<compile_context>
chip_gen: v5e
topology: v5e:2x2
jax: 0.10.0
libtpu: 0.0.40
codegen_flags: <defaults>
</compile_context>

<pallas_src>
import jax
import jax.numpy as jnp
from jax import lax
from jax.experimental import pallas as pl
from jax.experimental.pallas import tpu as pltpu


def _round_up(a, m):
    return ((a + m - 1) // m) * m


def simple_mf_kernel(x_ref,      # (T, Bb, D)   bf16  embedded items, time-major
                     wih0_ref,   # (D, 4H)      bf16  layer-0 input weights
                     whh0_ref,   # (H, 4H)      bf16  layer-0 recurrent weights
                     b0_ref,     # (1, 4H)      f32   layer-0 combined bias
                     wih1_ref,   # (H, 4H)      bf16  layer-1 input weights
                     whh1_ref,   # (H, 4H)      bf16  layer-1 recurrent weights
                     b1_ref,     # (1, 4H)      f32   layer-1 combined bias
                     uctx_ref,   # (Bb, H)      f32   user factors
                     uoff_ref,   # (Bb, 1)      f32   user offset
                     out_ref,    # (Bb, 1)      f32   result
                     z0_ref):    # (T, Bb, 4H)  bf16  scratch: layer-0 input gates
    T, Bb, D = x_ref.shape
    H = uctx_ref.shape[1]

    # ---- layer-0 input projection: ONE big MXU matmul, off the recurrence ----
    # (T, Bb, D) -> (T*Bb, D) is layout-preserving (Bb is a multiple of 16).
    x2d = x_ref[...].reshape(T * Bb, D)
    z0 = jnp.dot(x2d, wih0_ref[...],
                 preferred_element_type=jnp.float32) + b0_ref[...]
    z0_ref[...] = z0.astype(jnp.bfloat16).reshape(T, Bb, 4 * H)

    # Hoist the layer-1 bias broadcast out of the loop (JAX does not CSE it).
    b1b = jnp.broadcast_to(b1_ref[...], (Bb, 4 * H))

    def gates(z):
        # Gate columns were permuted to [i, f, o, g] in the wrapper: one
        # contiguous sigmoid over 3H lanes + one tanh over the last H lanes.
        # sigmoid(x) = 0.5*(tanh(0.5x)+1): 1 EUP op/elem instead of exp+recip.
        s = 0.5 * (jnp.tanh(0.5 * z[:, :3 * H]) + 1.0)
        g = jnp.tanh(z[:, 3 * H:])
        return s[:, :H], s[:, H:2 * H], s[:, 2 * H:3 * H], g

    def step(t, carry):
        h0, c0, h1, c1, z0rec, acc = carry
        # layer 0: the recurrent contribution z0rec was issued last iteration
        # (h0(-1)=0 -> zero initial term), so only gate math sits before the
        # next MXU pushes.
        i0, f0, o0, g0 = gates(z0_ref[t] + z0rec)
        c0 = f0 * c0 + i0 * g0
        h0 = o0 * jnp.tanh(c0)
        h0b = h0.astype(jnp.bfloat16)
        # Three independent bf16 MXU pushes, all depending only on h0(t)/h1(t-1):
        # skewed layer-0 recurrence for t+1, plus layer-1 input & recurrent.
        z0rec = jnp.dot(h0b, whh0_ref[...], preferred_element_type=jnp.float32)
        z1 = (jnp.dot(h0b, wih1_ref[...], preferred_element_type=jnp.float32)
              + jnp.dot(h1.astype(jnp.bfloat16), whh1_ref[...],
                        preferred_element_type=jnp.float32)
              + b1b)
        i1, f1, o1, g1 = gates(z1)
        c1 = f1 * c1 + i1 * g1
        h1 = o1 * jnp.tanh(c1)
        return h0, c0, h1, c1, z0rec, acc + h1

    zh = jnp.zeros((Bb, H), jnp.float32)
    zg = jnp.zeros((Bb, 4 * H), jnp.float32)
    # Full unroll for short T; partial unroll for long T (vreg pressure).
    unroll = True if T <= 16 else 8
    _, _, _, _, _, acc = lax.fori_loop(0, T, step, (zh, zh, zh, zh, zg, zh),
                                       unroll=unroll)

    sent = acc * (1.0 / T)                                   # mean over time (Bb, H)
    dot = jnp.sum(uctx_ref[...] * sent, axis=1, keepdims=True)
    # TODO(synk): lane-dense (1, Bb) output block would avoid the masked vst
    # of a last-dim-1 store; negligible at this grid length.
    out_ref[...] = dot + uoff_ref[...]                       # (Bb, 1)


def _pick_block_b(B, T, D, H, block_b, vmem_budget_bytes):
    """Largest batch tile (multiple of 16) that (a) fits the VMEM budget on all
    generations (v7x: 64 MiB/TC) and (b) yields >=2 grid blocks when B allows,
    so the batch axis actually shards across v7x's two TensorCores."""
    Bb = min(block_b, _round_up(B, 16))
    if _round_up(B, 16) >= 32:                       # >= 2 blocks when possible
        Bb = min(Bb, _round_up(pl.cdiv(B, 2), 16))

    def vmem_bytes(bb):
        x_b = 2 * T * bb * D * 2                     # double-buffered bf16 input
        z0_b = T * bb * 4 * H * 2                    # bf16 gate scratch
        w_b = (D + 3 * H) * 4 * H * 2 + 2 * 4 * H * 4
        u_b = 2 * bb * (H + 1) * 4                   # user ctx / offset blocks
        return x_b + z0_b + w_b + u_b

    while Bb > 16 and vmem_bytes(Bb) > vmem_budget_bytes:
        Bb -= 16
    return max(16, Bb)


def simple_mf_forward(user, item, params, *, block_b=256,
                      vmem_budget_bytes=40 * 1024 * 1024):
    """user: (B,) int32, item: (B, T) int32 -> (B,) float32"""
    B, T = item.shape
    H = params["user_factors"].shape[1]
    D = params["word_embedding"].shape[1]

    # ---- plain-JAX glue: gathers + weight prep ----
    # Gather directly time-major (T, B, D) in bf16 so the big activation is
    # written to HBM exactly once (no separate transpose pass).
    # TODO(synk): gather embedding rows in-kernel (scalar-prefetched `item`)
    # so (T, B, D) is never materialized in HBM at all.
    x = params["word_embedding"].astype(jnp.bfloat16)[item.T]   # (T, B, D) bf16
    user_ctx = params["user_factors"][user]                     # (B, H)
    user_off = params["user_offset"][user]                      # (B, 1)

    # PyTorch gate order [i, f, g, o] -> kernel order [i, f, o, g]
    perm = jnp.concatenate([jnp.arange(0, H), jnp.arange(H, 2 * H),
                            jnp.arange(3 * H, 4 * H), jnp.arange(2 * H, 3 * H)])
    # All matmul operands in bf16 (f32 MXU accumulation); biases stay f32.
    wih0 = params["w_ih_l0"][perm].T.astype(jnp.bfloat16)        # (D, 4H)
    whh0 = params["w_hh_l0"][perm].T.astype(jnp.bfloat16)        # (H, 4H)
    wih1 = params["w_ih_l1"][perm].T.astype(jnp.bfloat16)        # (H, 4H)
    whh1 = params["w_hh_l1"][perm].T.astype(jnp.bfloat16)        # (H, 4H)
    b0 = (params["b_ih_l0"] + params["b_hh_l0"])[perm][None, :]  # (1, 4H) f32
    b1 = (params["b_ih_l1"] + params["b_hh_l1"])[perm][None, :]  # (1, 4H) f32

    # ---- batch tiling (multiple of 16 = bf16 sublane tile) ----
    Bb = _pick_block_b(B, T, D, H, block_b, vmem_budget_bytes)
    B_pad = _round_up(B, Bb)
    if B_pad != B:
        pad = B_pad - B
        x = jnp.pad(x, ((0, 0), (0, pad), (0, 0)))
        user_ctx = jnp.pad(user_ctx, ((0, pad), (0, 0)))
        user_off = jnp.pad(user_off, ((0, pad), (0, 0)))

    const = lambda b: (0, 0)   # weights: same block every step -> VMEM-resident
    out = pl.pallas_call(
        simple_mf_kernel,
        out_shape=jax.ShapeDtypeStruct((B_pad, 1), jnp.float32),
        grid_spec=pltpu.PrefetchScalarGridSpec(
            num_scalar_prefetch=0,
            grid=(B_pad // Bb,),
            in_specs=[
                pl.BlockSpec((T, Bb, D), lambda b: (0, b, 0)),   # x (pipelined DMA)
                pl.BlockSpec((D, 4 * H), const),                 # wih0
                pl.BlockSpec((H, 4 * H), const),                 # whh0
                pl.BlockSpec((1, 4 * H), const),                 # b0
                pl.BlockSpec((H, 4 * H), const),                 # wih1
                pl.BlockSpec((H, 4 * H), const),                 # whh1
                pl.BlockSpec((1, 4 * H), const),                 # b1
                pl.BlockSpec((Bb, H), lambda b: (b, 0)),         # user_ctx
                pl.BlockSpec((Bb, 1), lambda b: (b, 0)),         # user_off
            ],
            out_specs=pl.BlockSpec((Bb, 1), lambda b: (b, 0)),
            scratch_shapes=[pltpu.VMEM((T, Bb, 4 * H), jnp.bfloat16)],
        ),
        compiler_params=pltpu.CompilerParams(
            dimension_semantics=("parallel",),   # shard batch blocks across TCs (v7x)
            vmem_limit_bytes=64 * 1024 * 1024,   # <= physical on v5e/v6e/v7x
        ),
    )(x, wih0, whh0, b0, wih1, whh1, b1, user_ctx, user_off)
    return out[:B, 0]


def make_params(key, user_size, vocab_size, n_factors, embed_dim):
    ks = jax.random.split(key, 12)

    def nrm(k, shape, scale=0.1):
        return (scale * jax.random.normal(k, shape)).astype(jnp.float32)

    word_emb = nrm(ks[0], (vocab_size, embed_dim))
    word_emb = word_emb.at[0].set(0.0)                   # padding_idx = 0
    H = n_factors
    return {
        "user_factors": nrm(ks[1], (user_size, n_factors)),
        "user_offset": nrm(ks[2], (user_size, 1)),
        "word_embedding": word_emb,
        "w_ih_l0": nrm(ks[3], (4 * H, embed_dim)),
        "w_hh_l0": nrm(ks[4], (4 * H, H)),
        "b_ih_l0": nrm(ks[5], (4 * H,)),
        "b_hh_l0": nrm(ks[6], (4 * H,)),
        "w_ih_l1": nrm(ks[7], (4 * H, H)),
        "w_hh_l1": nrm(ks[8], (4 * H, H)),
        "b_ih_l1": nrm(ks[9], (4 * H,)),
        "b_hh_l1": nrm(ks[10], (4 * H,)),
    }


def reference_forward(user, item, params):
    """Pure-JAX (f32) reference of the PyTorch forward (eval mode)."""
    H = params["user_factors"].shape[1]
    x = params["word_embedding"][item]                   # (B, T, D)
    B, T, D = x.shape

    def cell(x_t, h, c, wih, whh, bih, bhh):
        z = x_t @ wih.T + bih + h @ whh.T + bhh
        i = jax.nn.sigmoid(z[:, 0 * H:1 * H])
        f = jax.nn.sigmoid(z[:, 1 * H:2 * H])
        g = jnp.tanh(z[:, 2 * H:3 * H])
        o = jax.nn.sigmoid(z[:, 3 * H:4 * H])
        c = f * c + i * g
        h = o * jnp.tanh(c)
        return h, c

    h0 = c0 = h1 = c1 = jnp.zeros((B, H), jnp.float32)
    outs = []
    for t in range(T):
        h0, c0 = cell(x[:, t], h0, c0, params["w_ih_l0"], params["w_hh_l0"],
                      params["b_ih_l0"], params["b_hh_l0"])
        h1, c1 = cell(h0, h1, c1, params["w_ih_l1"], params["w_hh_l1"],
                      params["b_ih_l1"], params["b_hh_l1"])
        outs.append(h1)
    sent = jnp.stack(outs, axis=1).mean(axis=1)          # (B, H)
    uctx = params["user_factors"][user]
    uoff = params["user_offset"][user][:, 0]
    return jnp.sum(uctx * sent, axis=1) + uoff


if __name__ == "__main__":
    user_size, vocab_size, n_factors, embed_dim = 10, 50, 32, 32
    B, T = 2, 8

    key = jax.random.PRNGKey(0)
    kp, ku, ki = jax.random.split(key, 3)
    params = make_params(kp, user_size, vocab_size, n_factors, embed_dim)

    user = jax.random.randint(ku, (B,), 0, user_size, dtype=jnp.int32)
    item = jax.random.randint(ki, (B, T), 0, vocab_size, dtype=jnp.int32)

    out = simple_mf_forward(user, item, params)
    out = jax.block_until_ready(out)

    ref = reference_forward(user, item, params)
    assert out.shape == (B,)
    # bf16 matmul operands (f32 accumulation) -> slightly looser tolerance
    assert jnp.allclose(out, ref, rtol=2e-2, atol=2e-2), (out, ref)
    print("KERNEL_OK")
</pallas_src>

<mosaic_0001>
module attributes {stable_mosaic.version = 11 : i64} {
  func.func @simple_mf_kernel(%arg0: i32, %arg1: memref<8x16x32xbf16, #tpu.memory_space<vmem>>, %arg2: memref<32x128xbf16, #tpu.memory_space<vmem>>, %arg3: memref<32x128xbf16, #tpu.memory_space<vmem>>, %arg4: memref<1x128xf32, #tpu.memory_space<vmem>>, %arg5: memref<32x128xbf16, #tpu.memory_space<vmem>>, %arg6: memref<32x128xbf16, #tpu.memory_space<vmem>>, %arg7: memref<1x128xf32, #tpu.memory_space<vmem>>, %arg8: memref<16x32xf32, #tpu.memory_space<vmem>>, %arg9: memref<16x1xf32, #tpu.memory_space<vmem>>, %arg10: memref<16x1xf32, #tpu.memory_space<vmem>>, %arg11: memref<8x16x128xbf16, #tpu.memory_space<vmem>>) attributes {dimension_semantics = [#tpu.dimension_semantics<parallel>], iteration_bounds = array<i64: 1>, scalar_prefetch = 0 : i64, scratch_operands = 1 : i64, tpu.core_type = #tpu.core_type<tc>, window_params = [{transform_indices = @transform_0, window_bounds = array<i64: 8, 16, 32>}, {pipeline_mode = #tpu.pipeline_mode<synchronous>, transform_indices = @transform_1, window_bounds = array<i64: 32, 128>}, {pipeline_mode = #tpu.pipeline_mode<synchronous>, transform_indices = @transform_2, window_bounds = array<i64: 32, 128>}, {pipeline_mode = #tpu.pipeline_mode<synchronous>, transform_indices = @transform_3, window_bounds = array<i64: 1, 128>}, {pipeline_mode = #tpu.pipeline_mode<synchronous>, transform_indices = @transform_4, window_bounds = array<i64: 32, 128>}, {pipeline_mode = #tpu.pipeline_mode<synchronous>, transform_indices = @transform_5, window_bounds = array<i64: 32, 128>}, {pipeline_mode = #tpu.pipeline_mode<synchronous>, transform_indices = @transform_6, window_bounds = array<i64: 1, 128>}, {transform_indices = @transform_7, window_bounds = array<i64: 16, 32>}, {transform_indices = @transform_8, window_bounds = array<i64: 16, 1>}, {transform_indices = @transform_9, window_bounds = array<i64: 16, 1>}]} {
    %c0 = arith.constant 0 : index
    %c0_0 = arith.constant 0 : index
    %c0_1 = arith.constant 0 : index
    %0 = vector.load %arg1[%c0, %c0_0, %c0_1] : memref<8x16x32xbf16, #tpu.memory_space<vmem>>, vector<8x16x32xbf16>
    %1 = vector.shape_cast %0 : vector<8x16x32xbf16> to vector<128x32xbf16>
    %c0_2 = arith.constant 0 : index
    %c0_3 = arith.constant 0 : index
    %2 = vector.load %arg2[%c0_2, %c0_3] : memref<32x128xbf16, #tpu.memory_space<vmem>>, vector<32x128xbf16>
    %cst = arith.constant dense<0.000000e+00> : vector<128x128xf32>
    %3 = tpu.matmul %1, %2, %cst {dimension_numbers = #tpu.dot_dimension_numbers<[1], [0], [0], [1], [0, 0, 1, 1], [], []>} : vector<128x32xbf16>, vector<32x128xbf16>, vector<128x128xf32> -> vector<128x128xf32>
    %c0_4 = arith.constant 0 : index
    %c0_5 = arith.constant 0 : index
    %4 = vector.load %arg4[%c0_4, %c0_5] : memref<1x128xf32, #tpu.memory_space<vmem>>, vector<1x128xf32>
    %5 = vector.broadcast %4 : vector<1x128xf32> to vector<128x128xf32>
    %6 = arith.addf %3, %5 : vector<128x128xf32>
    %7 = arith.truncf %6 : vector<128x128xf32> to vector<128x128xbf16>
    %8 = vector.shape_cast %7 : vector<128x128xbf16> to vector<8x16x128xbf16>
    %c0_6 = arith.constant 0 : index
    %c0_7 = arith.constant 0 : index
    %c0_8 = arith.constant 0 : index
    %9 = vector.load %arg11[%c0_6, %c0_7, %c0_8] : memref<8x16x128xbf16, #tpu.memory_space<vmem>>, vector<8x16x128xbf16>
    tpu.vector_store %arg11[%c0_6, %c0_7, %c0_8], %8 {strides = array<i32>} : memref<8x16x128xbf16, #tpu.memory_space<vmem>>, vector<8x16x128xbf16>,
    %c0_9 = arith.constant 0 : index
    %c0_10 = arith.constant 0 : index
    %10 = vector.load %arg7[%c0_9, %c0_10] : memref<1x128xf32, #tpu.memory_space<vmem>>, vector<1x128xf32>
    %11 = vector.shape_cast %10 : vector<1x128xf32> to vector<1x128xf32>
    %12 = vector.broadcast %11 : vector<1x128xf32> to vector<16x128xf32>
    %cst_11 = arith.constant 0.000000e+00 : f32
    %13 = vector.broadcast %cst_11 : f32 to vector<16x32xf32>
    %cst_12 = arith.constant 0.000000e+00 : f32
    %14 = vector.broadcast %cst_12 : f32 to vector<16x128xf32>
    %c0_i32 = arith.constant 0 : i32
    %15 = arith.index_cast %c0_i32 : i32 to index
    %c0_13 = arith.constant 0 : index
    %c0_14 = arith.constant 0 : index
    %16 = vector.load %arg11[%15, %c0_13, %c0_14] : memref<8x16x128xbf16, #tpu.memory_space<vmem>>, vector<1x16x128xbf16>
    %17 = vector.shape_cast %16 : vector<1x16x128xbf16> to vector<16x128xbf16>
    %18 = arith.extf %17 : vector<16x128xbf16> to vector<16x128xf32>
    %19 = arith.addf %18, %14 : vector<16x128xf32>
    %20 = vector.extract_strided_slice %19 {offsets = [0, 0], sizes = [16, 96], strides = [1, 1]} : vector<16x128xf32> to vector<16x96xf32>
    %cst_15 = arith.constant 5.000000e-01 : f32
    %21 = vector.broadcast %cst_15 : f32 to vector<16x96xf32>
    %22 = arith.mulf %21, %20 : vector<16x96xf32>
    %23 = math.tanh %22 : vector<16x96xf32>
    %cst_16 = arith.constant 1.000000e+00 : f32
    %24 = vector.broadcast %cst_16 : f32 to vector<16x96xf32>
    %25 = arith.addf %23, %24 : vector<16x96xf32>
    %cst_17 = arith.constant 5.000000e-01 : f32
    %26 = vector.broadcast %cst_17 : f32 to vector<16x96xf32>
    %27 = arith.mulf %26, %25 : vector<16x96xf32>
    %28 = vector.extract_strided_slice %19 {offsets = [0, 96], sizes = [16, 32], strides = [1, 1]} : vector<16x128xf32> to vector<16x32xf32>
    %29 = math.tanh %28 : vector<16x32xf32>
    %30 = vector.extract_strided_slice %27 {offsets = [0, 0], sizes = [16, 32], strides = [1, 1]} : vector<16x96xf32> to vector<16x32xf32>
    %31 = vector.extract_strided_slice %27 {offsets = [0, 32], sizes = [16, 32], strides = [1, 1]} : vector<16x96xf32> to vector<16x32xf32>
    %32 = vector.extract_strided_slice %27 {offsets = [0, 64], sizes = [16, 32], strides = [1, 1]} : vector<16x96xf32> to vector<16x32xf32>
    %33 = arith.mulf %31, %13 : vector<16x32xf32>
    %34 = arith.mulf %30, %29 : vector<16x32xf32>
    %35 = arith.addf %33, %34 : vector<16x32xf32>
    %36 = math.tanh %35 : vector<16x32xf32>
    %37 = arith.mulf %32, %36 : vector<16x32xf32>
    %38 = arith.truncf %37 : vector<16x32xf32> to vector<16x32xbf16>
    %c0_18 = arith.constant 0 : index
    %c0_19 = arith.constant 0 : index
    %39 = vector.load %arg3[%c0_18, %c0_19] : memref<32x128xbf16, #tpu.memory_space<vmem>>, vector<32x128xbf16>
    %cst_20 = arith.constant dense<0.000000e+00> : vector<16x128xf32>
    %40 = tpu.matmul %38, %39, %cst_20 {dimension_numbers = #tpu.dot_dimension_numbers<[1], [0], [0], [1], [0, 0, 1, 1], [], []>} : vector<16x32xbf16>, vector<32x128xbf16>, vector<16x128xf32> -> vector<16x128xf32>
    %c0_21 = arith.constant 0 : index
    %c0_22 = arith.constant 0 : index
    %41 = vector.load %arg5[%c0_21, %c0_22] : memref<32x128xbf16, #tpu.memory_space<vmem>>, vector<32x128xbf16>
    %cst_23 = arith.constant dense<0.000000e+00> : vector<16x128xf32>
    %42 = tpu.matmul %38, %41, %cst_23 {dimension_numbers = #tpu.dot_dimension_numbers<[1], [0], [0], [1], [0, 0, 1, 1], [], []>} : vector<16x32xbf16>, vector<32x128xbf16>, vector<16x128xf32> -> vector<16x128xf32>
    %43 = arith.truncf %13 : vector<16x32xf32> to vector<16x32xbf16>
    %c0_24 = arith.constant 0 : index
    %c0_25 = arith.constant 0 : index
    %44 = vector.load %arg6[%c0_24, %c0_25] : memref<32x128xbf16, #tpu.memory_space<vmem>>, vector<32x128xbf16>
    %cst_26 = arith.constant dense<0.000000e+00> : vector<16x128xf32>
    %45 = tpu.matmul %43, %44, %cst_26 {dimension_numbers = #tpu.dot_dimension_numbers<[1], [0], [0], [1], [0, 0, 1, 1], [], []>} : vector<16x32xbf16>, vector<32x128xbf16>, vector<16x128xf32> -> vector<16x128xf32>
    %46 = arith.addf %42, %45 : vector<16x128xf32>
    %47 = arith.addf %46, %12 : vector<16x128xf32>
    %48 = vector.extract_strided_slice %47 {offsets = [0, 0], sizes = [16, 96], strides = [1, 1]} : vector<16x128xf32> to vector<16x96xf32>
    %cst_27 = arith.constant 5.000000e-01 : f32
    %49 = vector.broadcast %cst_27 : f32 to vector<16x96xf32>
    %50 = arith.mulf %49, %48 : vector<16x96xf32>
    %51 = math.tanh %50 : vector<16x96xf32>
    %cst_28 = arith.constant 1.000000e+00 : f32
    %52 = vector.broadcast %cst_28 : f32 to vector<16x96xf32>
    %53 = arith.addf %51, %52 : vector<16x96xf32>
    %cst_29 = arith.constant 5.000000e-01 : f32
    %54 = vector.broadcast %cst_29 : f32 to vector<16x96xf32>
    %55 = arith.mulf %54, %53 : vector<16x96xf32>
    %56 = vector.extract_strided_slice %47 {offsets = [0, 96], sizes = [16, 32], strides = [1, 1]} : vector<16x128xf32> to vector<16x32xf32>
    %57 = math.tanh %56 : vector<16x32xf32>
    %58 = vector.extract_strided_slice %55 {offsets = [0, 0], sizes = [16, 32], strides = [1, 1]} : vector<16x96xf32> to vector<16x32xf32>
    %59 = vector.extract_strided_slice %55 {offsets = [0, 32], sizes = [16, 32], strides = [1, 1]} : vector<16x96xf32> to vector<16x32xf32>
    %60 = vector.extract_strided_slice %55 {offsets = [0, 64], sizes = [16, 32], strides = [1, 1]} : vector<16x96xf32> to vector<16x32xf32>
    %61 = arith.mulf %59, %13 : vector<16x32xf32>
    %62 = arith.mulf %58, %57 : vector<16x32xf32>
    %63 = arith.addf %61, %62 : vector<16x32xf32>
    %64 = math.tanh %63 : vector<16x32xf32>
    %65 = arith.mulf %60, %64 : vector<16x32xf32>
    %66 = arith.addf %13, %65 : vector<16x32xf32>
    %c1_i32 = arith.constant 1 : i32
    %67 = arith.index_cast %c1_i32 : i32 to index
    %c0_30 = arith.constant 0 : index
    %c0_31 = arith.constant 0 : index
    %68 = vector.load %arg11[%67, %c0_30, %c0_31] : memref<8x16x128xbf16, #tpu.memory_space<vmem>>, vector<1x16x128xbf16>
    %69 = vector.shape_cast %68 : vector<1x16x128xbf16> to vector<16x128xbf16>
    %70 = arith.extf %69 : vector<16x128xbf16> to vector<16x128xf32>
    %71 = arith.addf %70, %40 : vector<16x128xf32>
    %72 = vector.extract_strided_slice %71 {offsets = [0, 0], sizes = [16, 96], strides = [1, 1]} : vector<16x128xf32> to vector<16x96xf32>
    %cst_32 = arith.constant 5.000000e-01 : f32
    %73 = vector.broadcast %cst_32 : f32 to vector<16x96xf32>
    %74 = arith.mulf %73, %72 : vector<16x96xf32>
    %75 = math.tanh %74 : vector<16x96xf32>
    %cst_33 = arith.constant 1.000000e+00 : f32
    %76 = vector.broadcast %cst_33 : f32 to vector<16x96xf32>
    %77 = arith.addf %75, %76 : vector<16x96xf32>
    %cst_34 = arith.constant 5.000000e-01 : f32
    %78 = vector.broadcast %cst_34 : f32 to vector<16x96xf32>
    %79 = arith.mulf %78, %77 : vector<16x96xf32>
    %80 = vector.extract_strided_slice %71 {offsets = [0, 96], sizes = [16, 32], strides = [1, 1]} : vector<16x128xf32> to vector<16x32xf32>
    %81 = math.tanh %80 : vector<16x32xf32>
    %82 = vector.extract_strided_slice %79 {offsets = [0, 0], sizes = [16, 32], strides = [1, 1]} : vector<16x96xf32> to vector<16x32xf32>
    %83 = vector.extract_strided_slice %79 {offsets = [0, 32], sizes = [16, 32], strides = [1, 1]} : vector<16x96xf32> to vector<16x32xf32>
    %84 = vector.extract_strided_slice %79 {offsets = [0, 64], sizes = [16, 32], strides = [1, 1]} : vector<16x96xf32> to vector<16x32xf32>
    %85 = arith.mulf %83, %35 : vector<16x32xf32>
    %86 = arith.mulf %82, %81 : vector<16x32xf32>
    %87 = arith.addf %85, %86 : vector<16x32xf32>
    %88 = math.tanh %87 : vector<16x32xf32>
    %89 = arith.mulf %84, %88 : vector<16x32xf32>
    %90 = arith.truncf %89 : vector<16x32xf32> to vector<16x32xbf16>
    %c0_35 = arith.constant 0 : index
    %c0_36 = arith.constant 0 : index
    %91 = vector.load %arg3[%c0_35, %c0_36] : memref<32x128xbf16, #tpu.memory_space<vmem>>, vector<32x128xbf16>
    %cst_37 = arith.constant dense<0.000000e+00> : vector<16x128xf32>
    %92 = tpu.matmul %90, %91, %cst_37 {dimension_numbers = #tpu.dot_dimension_numbers<[1], [0], [0], [1], [0, 0, 1, 1], [], []>} : vector<16x32xbf16>, vector<32x128xbf16>, vector<16x128xf32> -> vector<16x128xf32>
    %c0_38 = arith.constant 0 : index
    %c0_39 = arith.constant 0 : index
    %93 = vector.load %arg5[%c0_38, %c0_39] : memref<32x128xbf16, #tpu.memory_space<vmem>>, vector<32x128xbf16>
    %cst_40 = arith.constant dense<0.000000e+00> : vector<16x128xf32>
    %94 = tpu.matmul %90, %93, %cst_40 {dimension_numbers = #tpu.dot_dimension_numbers<[1], [0], [0], [1], [0, 0, 1, 1], [], []>} : vector<16x32xbf16>, vector<32x128xbf16>, vector<16x128xf32> -> vector<16x128xf32>
    %95 = arith.truncf %65 : vector<16x32xf32> to vector<16x32xbf16>
    %c0_41 = arith.constant 0 : index
    %c0_42 = arith.constant 0 : index
    %96 = vector.load %arg6[%c0_41, %c0_42] : memref<32x128xbf16, #tpu.memory_space<vmem>>, vector<32x128xbf16>
    %cst_43 = arith.constant dense<0.000000e+00> : vector<16x128xf32>
    %97 = tpu.matmul %95, %96, %cst_43 {dimension_numbers = #tpu.dot_dimension_numbers<[1], [0], [0], [1], [0, 0, 1, 1], [], []>} : vector<16x32xbf16>, vector<32x128xbf16>, vector<16x128xf32> -> vector<16x128xf32>
    %98 = arith.addf %94, %97 : vector<16x128xf32>
    %99 = arith.addf %98, %12 : vector<16x128xf32>
    %100 = vector.extract_strided_slice %99 {offsets = [0, 0], sizes = [16, 96], strides = [1, 1]} : vector<16x128xf32> to vector<16x96xf32>
    %cst_44 = arith.constant 5.000000e-01 : f32
    %101 = vector.broadcast %cst_44 : f32 to vector<16x96xf32>
    %102 = arith.mulf %101, %100 : vector<16x96xf32>
    %103 = math.tanh %102 : vector<16x96xf32>
    %cst_45 = arith.constant 1.000000e+00 : f32
    %104 = vector.broadcast %cst_45 : f32 to vector<16x96xf32>
    %105 = arith.addf %103, %104 : vector<16x96xf32>
    %cst_46 = arith.constant 5.000000e-01 : f32
    %106 = vector.broadcast %cst_46 : f32 to vector<16x96xf32>
    %107 = arith.mulf %106, %105 : vector<16x96xf32>
    %108 = vector.extract_strided_slice %99 {offsets = [0, 96], sizes = [16, 32], strides = [1, 1]} : vector<16x128xf32> to vector<16x32xf32>
    %109 = math.tanh %108 : vector<16x32xf32>
    %110 = vector.extract_strided_slice %107 {offsets = [0, 0], sizes = [16, 32], strides = [1, 1]} : vector<16x96xf32> to vector<16x32xf32>
    %111 = vector.extract_strided_slice %107 {offsets = [0, 32], sizes = [16, 32], strides = [1, 1]} : vector<16x96xf32> to vector<16x32xf32>
    %112 = vector.extract_strided_slice %107 {offsets = [0, 64], sizes = [16, 32], strides = [1, 1]} : vector<16x96xf32> to vector<16x32xf32>
    %113 = arith.mulf %111, %63 : vector<16x32xf32>
    %114 = arith.mulf %110, %109 : vector<16x32xf32>
    %115 = arith.addf %113, %114 : vector<16x32xf32>
    %116 = math.tanh %115 : vector<16x32xf32>
    %117 = arith.mulf %112, %116 : vector<16x32xf32>
    %118 = arith.addf %66, %117 : vector<16x32xf32>
    %c2_i32 = arith.constant 2 : i32
    %119 = arith.index_cast %c2_i32 : i32 to index
    %c0_47 = arith.constant 0 : index
    %c0_48 = arith.constant 0 : index
    %120 = vector.load %arg11[%119, %c0_47, %c0_48] : memref<8x16x128xbf16, #tpu.memory_space<vmem>>, vector<1x16x128xbf16>
    %121 = vector.shape_cast %120 : vector<1x16x128xbf16> to vector<16x128xbf16>
    %122 = arith.extf %121 : vector<16x128xbf16> to vector<16x128xf32>
    %123 = arith.addf %122, %92 : vector<16x128xf32>
    %124 = vector.extract_strided_slice %123 {offsets = [0, 0], sizes = [16, 96], strides = [1, 1]} : vector<16x128xf32> to vector<16x96xf32>
    %cst_49 = arith.constant 5.000000e-01 : f32
    %125 = vector.broadcast %cst_49 : f32 to vector<16x96xf32>
    %126 = arith.mulf %125, %124 : vector<16x96xf32>
    %127 = math.tanh %126 : vector<16x96xf32>
    %cst_50 = arith.constant 1.000000e+00 : f32
    %128 = vector.broadcast %cst_50 : f32 to vector<16x96xf32>
    %129 = arith.addf %127, %128 : vector<16x96xf32>
    %cst_51 = arith.constant 5.000000e-01 : f32
    %130 = vector.broadcast %cst_51 : f32 to vector<16x96xf32>
    %131 = arith.mulf %130, %129 : vector<16x96xf32>
    %132 = vector.extract_strided_slice %123 {offsets = [0, 96], sizes = [16, 32], strides = [1, 1]} : vector<16x128xf32> to vector<16x32xf32>
    %133 = math.tanh %132 : vector<16x32xf32>
    %134 = vector.extract_strided_slice %131 {offsets = [0, 0], sizes = [16, 32], strides = [1, 1]} : vector<16x96xf32> to vector<16x32xf32>
    %135 = vector.extract_strided_slice %131 {offsets = [0, 32], sizes = [16, 32], strides = [1, 1]} : vector<16x96xf32> to vector<16x32xf32>
    %136 = vector.extract_strided_slice %131 {offsets = [0, 64], sizes = [16, 32], strides = [1, 1]} : vector<16x96xf32> to vector<16x32xf32>
    %137 = arith.mulf %135, %87 : vector<16x32xf32>
    %138 = arith.mulf %134, %133 : vector<16x32xf32>
    %139 = arith.addf %137, %138 : vector<16x32xf32>
    %140 = math.tanh %139 : vector<16x32xf32>
    %141 = arith.mulf %136, %140 : vector<16x32xf32>
    %142 = arith.truncf %141 : vector<16x32xf32> to vector<16x32xbf16>
    %c0_52 = arith.constant 0 : index
    %c0_53 = arith.constant 0 : index
    %143 = vector.load %arg3[%c0_52, %c0_53] : memref<32x128xbf16, #tpu.memory_space<vmem>>, vector<32x128xbf16>
    %cst_54 = arith.constant dense<0.000000e+00> : vector<16x128xf32>
    %144 = tpu.matmul %142, %143, %cst_54 {dimension_numbers = #tpu.dot_dimension_numbers<[1], [0], [0], [1], [0, 0, 1, 1], [], []>} : vector<16x32xbf16>, vector<32x128xbf16>, vector<16x128xf32> -> vector<16x128xf32>
    %c0_55 = arith.constant 0 : index
    %c0_56 = arith.constant 0 : index
    %145 = vector.load %arg5[%c0_55, %c0_56] : memref<32x128xbf16, #tpu.memory_space<vmem>>, vector<32x128xbf16>
    %cst_57 = arith.constant dense<0.000000e+00> : vector<16x128xf32>
    %146 = tpu.matmul %142, %145, %cst_57 {dimension_numbers = #tpu.dot_dimension_numbers<[1], [0], [0], [1], [0, 0, 1, 1], [], []>} : vector<16x32xbf16>, vector<32x128xbf16>, vector<16x128xf32> -> vector<16x128xf32>
    %147 = arith.truncf %117 : vector<16x32xf32> to vector<16x32xbf16>
    %c0_58 = arith.constant 0 : index
    %c0_59 = arith.constant 0 : index
    %148 = vector.load %arg6[%c0_58, %c0_59] : memref<32x128xbf16, #tpu.memory_space<vmem>>, vector<32x128xbf16>
    %cst_60 = arith.constant dense<0.000000e+00> : vector<16x128xf32>
    %149 = tpu.matmul %147, %148, %cst_60 {dimension_numbers = #tpu.dot_dimension_numbers<[1], [0], [0], [1], [0, 0, 1, 1], [], []>} : vector<16x32xbf16>, vector<32x128xbf16>, vector<16x128xf32> -> vector<16x128xf32>
    %150 = arith.addf %146, %149 : vector<16x128xf32>
    %151 = arith.addf %150, %12 : vector<16x128xf32>
    %152 = vector.extract_strided_slice %151 {offsets = [0, 0], sizes = [16, 96], strides = [1, 1]} : vector<16x128xf32> to vector<16x96xf32>
    %cst_61 = arith.constant 5.000000e-01 : f32
    %153 = vector.broadcast %cst_61 : f32 to vector<16x96xf32>
    %154 = arith.mulf %153, %152 : vector<16x96xf32>
    %155 = math.tanh %154 : vector<16x96xf32>
    %cst_62 = arith.constant 1.000000e+00 : f32
    %156 = vector.broadcast %cst_62 : f32 to vector<16x96xf32>
    %157 = arith.addf %155, %156 : vector<16x96xf32>
    %cst_63 = arith.constant 5.000000e-01 : f32
    %158 = vector.broadcast %cst_63 : f32 to vector<16x96xf32>
    %159 = arith.mulf %158, %157 : vector<16x96xf32>
    %160 = vector.extract_strided_slice %151 {offsets = [0, 96], sizes = [16, 32], strides = [1, 1]} : vector<16x128xf32> to vector<16x32xf32>
    %161 = math.tanh %160 : vector<16x32xf32>
    %162 = vector.extract_strided_slice %159 {offsets = [0, 0], sizes = [16, 32], strides = [1, 1]} : vector<16x96xf32> to vector<16x32xf32>
    %163 = vector.extract_strided_slice %159 {offsets = [0, 32], sizes = [16, 32], strides = [1, 1]} : vector<16x96xf32> to vector<16x32xf32>
    %164 = vector.extract_strided_slice %159 {offsets = [0, 64], sizes = [16, 32], strides = [1, 1]} : vector<16x96xf32> to vector<16x32xf32>
    %165 = arith.mulf %163, %115 : vector<16x32xf32>
    %166 = arith.mulf %162, %161 : vector<16x32xf32>
    %167 = arith.addf %165, %166 : vector<16x32xf32>
    %168 = math.tanh %167 : vector<16x32xf32>
    %169 = arith.mulf %164, %168 : vector<16x32xf32>
    %170 = arith.addf %118, %169 : vector<16x32xf32>
    %c3_i32 = arith.constant 3 : i32
    %171 = arith.index_cast %c3_i32 : i32 to index
    %c0_64 = arith.constant 0 : index
    %c0_65 = arith.constant 0 : index
    %172 = vector.load %arg11[%171, %c0_64, %c0_65] : memref<8x16x128xbf16, #tpu.memory_space<vmem>>, vector<1x16x128xbf16>
    %173 = vector.shape_cast %172 : vector<1x16x128xbf16> to vector<16x128xbf16>
    %174 = arith.extf %173 : vector<16x128xbf16> to vector<16x128xf32>
    %175 = arith.addf %174, %144 : vector<16x128xf32>
    %176 = vector.extract_strided_slice %175 {offsets = [0, 0], sizes = [16, 96], strides = [1, 1]} : vector<16x128xf32> to vector<16x96xf32>
    %cst_66 = arith.constant 5.000000e-01 : f32
    %177 = vector.broadcast %cst_66 : f32 to vector<16x96xf32>
    %178 = arith.mulf %177, %176 : vector<16x96xf32>
    %179 = math.tanh %178 : vector<16x96xf32>
    %cst_67 = arith.constant 1.000000e+00 : f32
    %180 = vector.broadcast %cst_67 : f32 to vector<16x96xf32>
    %181 = arith.addf %179, %180 : vector<16x96xf32>
    %cst_68 = arith.constant 5.000000e-01 : f32
    %182 = vector.broadcast %cst_68 : f32 to vector<16x96xf32>
    %183 = arith.mulf %182, %181 : vector<16x96xf32>
    %184 = vector.extract_strided_slice %175 {offsets = [0, 96], sizes = [16, 32], strides = [1, 1]} : vector<16x128xf32> to vector<16x32xf32>
    %185 = math.tanh %184 : vector<16x32xf32>
    %186 = vector.extract_strided_slice %183 {offsets = [0, 0], sizes = [16, 32], strides = [1, 1]} : vector<16x96xf32> to vector<16x32xf32>
    %187 = vector.extract_strided_slice %183 {offsets = [0, 32], sizes = [16, 32], strides = [1, 1]} : vector<16x96xf32> to vector<16x32xf32>
    %188 = vector.extract_strided_slice %183 {offsets = [0, 64], sizes = [16, 32], strides = [1, 1]} : vector<16x96xf32> to vector<16x32xf32>
    %189 = arith.mulf %187, %139 : vector<16x32xf32>
    %190 = arith.mulf %186, %185 : vector<16x32xf32>
    %191 = arith.addf %189, %190 : vector<16x32xf32>
    %192 = math.tanh %191 : vector<16x32xf32>
    %193 = arith.mulf %188, %192 : vector<16x32xf32>
    %194 = arith.truncf %193 : vector<16x32xf32> to vector<16x32xbf16>
    %c0_69 = arith.constant 0 : index
    %c0_70 = arith.constant 0 : index
    %195 = vector.load %arg3[%c0_69, %c0_70] : memref<32x128xbf16, #tpu.memory_space<vmem>>, vector<32x128xbf16>
    %cst_71 = arith.constant dense<0.000000e+00> : vector<16x128xf32>
    %196 = tpu.matmul %194, %195, %cst_71 {dimension_numbers = #tpu.dot_dimension_numbers<[1], [0], [0], [1], [0, 0, 1, 1], [], []>} : vector<16x32xbf16>, vector<32x128xbf16>, vector<16x128xf32> -> vector<16x128xf32>
    %c0_72 = arith.constant 0 : index
    %c0_73 = arith.constant 0 : index
    %197 = vector.load %arg5[%c0_72, %c0_73] : memref<32x128xbf16, #tpu.memory_space<vmem>>, vector<32x128xbf16>
    %cst_74 = arith.constant dense<0.000000e+00> : vector<16x128xf32>
    %198 = tpu.matmul %194, %197, %cst_74 {dimension_numbers = #tpu.dot_dimension_numbers<[1], [0], [0], [1], [0, 0, 1, 1], [], []>} : vector<16x32xbf16>, vector<32x128xbf16>, vector<16x128xf32> -> vector<16x128xf32>
    %199 = arith.truncf %169 : vector<16x32xf32> to vector<16x32xbf16>
    %c0_75 = arith.constant 0 : index
    %c0_76 = arith.constant 0 : index
    %200 = vector.load %arg6[%c0_75, %c0_76] : memref<32x128xbf16, #tpu.memory_space<vmem>>, vector<32x128xbf16>
    %cst_77 = arith.constant dense<0.000000e+00> : vector<16x128xf32>
    %201 = tpu.matmul %199, %200, %cst_77 {dimension_numbers = #tpu.dot_dimension_numbers<[1], [0], [0], [1], [0, 0, 1, 1], [], []>} : vector<16x32xbf16>, vector<32x128xbf16>, vector<16x128xf32> -> vector<16x128xf32>
    %202 = arith.addf %198, %201 : vector<16x128xf32>
    %203 = arith.addf %202, %12 : vector<16x128xf32>
    %204 = vector.extract_strided_slice %203 {offsets = [0, 0], sizes = [16, 96], strides = [1, 1]} : vector<16x128xf32> to vector<16x96xf32>
    %cst_78 = arith.constant 5.000000e-01 : f32
    %205 = vector.broadcast %cst_78 : f32 to vector<16x96xf32>
    %206 = arith.mulf %205, %204 : vector<16x96xf32>
    %207 = math.tanh %206 : vector<16x96xf32>
    %cst_79 = arith.constant 1.000000e+00 : f32
    %208 = vector.broadcast %cst_79 : f32 to vector<16x96xf32>
    %209 = arith.addf %207, %208 : vector<16x96xf32>
    %cst_80 = arith.constant 5.000000e-01 : f32
    %210 = vector.broadcast %cst_80 : f32 to vector<16x96xf32>
    %211 = arith.mulf %210, %209 : vector<16x96xf32>
    %212 = vector.extract_strided_slice %203 {offsets = [0, 96], sizes = [16, 32], strides = [1, 1]} : vector<16x128xf32> to vector<16x32xf32>
    %213 = math.tanh %212 : vector<16x32xf32>
    %214 = vector.extract_strided_slice %211 {offsets = [0, 0], sizes = [16, 32], strides = [1, 1]} : vector<16x96xf32> to vector<16x32xf32>
    %215 = vector.extract_strided_slice %211 {offsets = [0, 32], sizes = [16, 32], strides = [1, 1]} : vector<16x96xf32> to vector<16x32xf32>
    %216 = vector.extract_strided_slice %211 {offsets = [0, 64], sizes = [16, 32], strides = [1, 1]} : vector<16x96xf32> to vector<16x32xf32>
    %217 = arith.mulf %215, %167 : vector<16x32xf32>
    %218 = arith.mulf %214, %213 : vector<16x32xf32>
    %219 = arith.addf %217, %218 : vector<16x32xf32>
    %220 = math.tanh %219 : vector<16x32xf32>
    %221 = arith.mulf %216, %220 : vector<16x32xf32>
    %222 = arith.addf %170, %221 : vector<16x32xf32>
    %c4_i32 = arith.constant 4 : i32
    %223 = arith.index_cast %c4_i32 : i32 to index
    %c0_81 = arith.constant 0 : index
    %c0_82 = arith.constant 0 : index
    %224 = vector.load %arg11[%223, %c0_81, %c0_82] : memref<8x16x128xbf16, #tpu.memory_space<vmem>>, vector<1x16x128xbf16>
    %225 = vector.shape_cast %224 : vector<1x16x128xbf16> to vector<16x128xbf16>
    %226 = arith.extf %225 : vector<16x128xbf16> to vector<16x128xf32>
    %227 = arith.addf %226, %196 : vector<16x128xf32>
    %228 = vector.extract_strided_slice %227 {offsets = [0, 0], sizes = [16, 96], strides = [1, 1]} : vector<16x128xf32> to vector<16x96xf32>
    %cst_83 = arith.constant 5.000000e-01 : f32
    %229 = vector.broadcast %cst_83 : f32 to vector<16x96xf32>
    %230 = arith.mulf %229, %228 : vector<16x96xf32>
    %231 = math.tanh %230 : vector<16x96xf32>
    %cst_84 = arith.constant 1.000000e+00 : f32
    %232 = vector.broadcast %cst_84 : f32 to vector<16x96xf32>
    %233 = arith.addf %231, %232 : vector<16x96xf32>
    %cst_85 = arith.constant 5.000000e-01 : f32
    %234 = vector.broadcast %cst_85 : f32 to vector<16x96xf32>
    %235 = arith.mulf %234, %233 : vector<16x96xf32>
    %236 = vector.extract_strided_slice %227 {offsets = [0, 96], sizes = [16, 32], strides = [1, 1]} : vector<16x128xf32> to vector<16x32xf32>
    %237 = math.tanh %236 : vector<16x32xf32>
    %238 = vector.extract_strided_slice %235 {offsets = [0, 0], sizes = [16, 32], strides = [1, 1]} : vector<16x96xf32> to vector<16x32xf32>
    %239 = vector.extract_strided_slice %235 {offsets = [0, 32], sizes = [16, 32], strides = [1, 1]} : vector<16x96xf32> to vector<16x32xf32>
    %240 = vector.extract_strided_slice %235 {offsets = [0, 64], sizes = [16, 32], strides = [1, 1]} : vector<16x96xf32> to vector<16x32xf32>
    %241 = arith.mulf %239, %191 : vector<16x32xf32>
    %242 = arith.mulf %238, %237 : vector<16x32xf32>
    %243 = arith.addf %241, %242 : vector<16x32xf32>
    %244 = math.tanh %243 : vector<16x32xf32>
    %245 = arith.mulf %240, %244 : vector<16x32xf32>
    %246 = arith.truncf %245 : vector<16x32xf32> to vector<16x32xbf16>
    %c0_86 = arith.constant 0 : index
    %c0_87 = arith.constant 0 : index
    %247 = vector.load %arg3[%c0_86, %c0_87] : memref<32x128xbf16, #tpu.memory_space<vmem>>, vector<32x128xbf16>
    %cst_88 = arith.constant dense<0.000000e+00> : vector<16x128xf32>
    %248 = tpu.matmul %246, %247, %cst_88 {dimension_numbers = #tpu.dot_dimension_numbers<[1], [0], [0], [1], [0, 0, 1, 1], [], []>} : vector<16x32xbf16>, vector<32x128xbf16>, vector<16x128xf32> -> vector<16x128xf32>
    %c0_89 = arith.constant 0 : index
    %c0_90 = arith.constant 0 : index
    %249 = vector.load %arg5[%c0_89, %c0_90] : memref<32x128xbf16, #tpu.memory_space<vmem>>, vector<32x128xbf16>
    %cst_91 = arith.constant dense<0.000000e+00> : vector<16x128xf32>
    %250 = tpu.matmul %246, %249, %cst_91 {dimension_numbers = #tpu.dot_dimension_numbers<[1], [0], [0], [1], [0, 0, 1, 1], [], []>} : vector<16x32xbf16>, vector<32x128xbf16>, vector<16x128xf32> -> vector<16x128xf32>
    %251 = arith.truncf %221 : vector<16x32xf32> to vector<16x32xbf16>
    %c0_92 = arith.constant 0 : index
    %c0_93 = arith.constant 0 : index
    %252 = vector.load %arg6[%c0_92, %c0_93] : memref<32x128xbf16, #tpu.memory_space<vmem>>, vector<32x128xbf16>
    %cst_94 = arith.constant dense<0.000000e+00> : vector<16x128xf32>
    %253 = tpu.matmul %251, %252, %cst_94 {dimension_numbers = #tpu.dot_dimension_numbers<[1], [0], [0], [1], [0, 0, 1, 1], [], []>} : vector<16x32xbf16>, vector<32x128xbf16>, vector<16x128xf32> -> vector<16x128xf32>
    %254 = arith.addf %250, %253 : vector<16x128xf32>
    %255 = arith.addf %254, %12 : vector<16x128xf32>
    %256 = vector.extract_strided_slice %255 {offsets = [0, 0], sizes = [16, 96], strides = [1, 1]} : vector<16x128xf32> to vector<16x96xf32>
    %cst_95 = arith.constant 5.000000e-01 : f32
    %257 = vector.broadcast %cst_95 : f32 to vector<16x96xf32>
    %258 = arith.mulf %257, %256 : vector<16x96xf32>
    %259 = math.tanh %258 : vector<16x96xf32>
    %cst_96 = arith.constant 1.000000e+00 : f32
    %260 = vector.broadcast %cst_96 : f32 to vector<16x96xf32>
    %261 = arith.addf %259, %260 : vector<16x96xf32>
    %cst_97 = arith.constant 5.000000e-01 : f32
    %262 = vector.broadcast %cst_97 : f32 to vector<16x96xf32>
    %263 = arith.mulf %262, %261 : vector<16x96xf32>
    %264 = vector.extract_strided_slice %255 {offsets = [0, 96], sizes = [16, 32], strides = [1, 1]} : vector<16x128xf32> to vector<16x32xf32>
    %265 = math.tanh %264 : vector<16x32xf32>
    %266 = vector.extract_strided_slice %263 {offsets = [0, 0], sizes = [16, 32], strides = [1, 1]} : vector<16x96xf32> to vector<16x32xf32>
    %267 = vector.extract_strided_slice %263 {offsets = [0, 32], sizes = [16, 32], strides = [1, 1]} : vector<16x96xf32> to vector<16x32xf32>
    %268 = vector.extract_strided_slice %263 {offsets = [0, 64], sizes = [16, 32], strides = [1, 1]} : vector<16x96xf32> to vector<16x32xf32>
    %269 = arith.mulf %267, %219 : vector<16x32xf32>
    %270 = arith.mulf %266, %265 : vector<16x32xf32>
    %271 = arith.addf %269, %270 : vector<16x32xf32>
    %272 = math.tanh %271 : vector<16x32xf32>
    %273 = arith.mulf %268, %272 : vector<16x32xf32>
    %274 = arith.addf %222, %273 : vector<16x32xf32>
    %c5_i32 = arith.constant 5 : i32
    %275 = arith.index_cast %c5_i32 : i32 to index
    %c0_98 = arith.constant 0 : index
    %c0_99 = arith.constant 0 : index
    %276 = vector.load %arg11[%275, %c0_98, %c0_99] : memref<8x16x128xbf16, #tpu.memory_space<vmem>>, vector<1x16x128xbf16>
    %277 = vector.shape_cast %276 : vector<1x16x128xbf16> to vector<16x128xbf16>
    %278 = arith.extf %277 : vector<16x128xbf16> to vector<16x128xf32>
    %279 = arith.addf %278, %248 : vector<16x128xf32>
    %280 = vector.extract_strided_slice %279 {offsets = [0, 0], sizes = [16, 96], strides = [1, 1]} : vector<16x128xf32> to vector<16x96xf32>
    %cst_100 = arith.constant 5.000000e-01 : f32
    %281 = vector.broadcast %cst_100 : f32 to vector<16x96xf32>
    %282 = arith.mulf %281, %280 : vector<16x96xf32>
    %283 = math.tanh %282 : vector<16x96xf32>
    %cst_101 = arith.constant 1.000000e+00 : f32
    %284 = vector.broadcast %cst_101 : f32 to vector<16x96xf32>
    %285 = arith.addf %283, %284 : vector<16x96xf32>
    %cst_102 = arith.constant 5.000000e-01 : f32
    %286 = vector.broadcast %cst_102 : f32 to vector<16x96xf32>
    %287 = arith.mulf %286, %285 : vector<16x96xf32>
    %288 = vector.extract_strided_slice %279 {offsets = [0, 96], sizes = [16, 32], strides = [1, 1]} : vector<16x128xf32> to vector<16x32xf32>
    %289 = math.tanh %288 : vector<16x32xf32>
    %290 = vector.extract_strided_slice %287 {offsets = [0, 0], sizes = [16, 32], strides = [1, 1]} : vector<16x96xf32> to vector<16x32xf32>
    %291 = vector.extract_strided_slice %287 {offsets = [0, 32], sizes = [16, 32], strides = [1, 1]} : vector<16x96xf32> to vector<16x32xf32>
    %292 = vector.extract_strided_slice %287 {offsets = [0, 64], sizes = [16, 32], strides = [1, 1]} : vector<16x96xf32> to vector<16x32xf32>
    %293 = arith.mulf %291, %243 : vector<16x32xf32>
    %294 = arith.mulf %290, %289 : vector<16x32xf32>
    %295 = arith.addf %293, %294 : vector<16x32xf32>
    %296 = math.tanh %295 : vector<16x32xf32>
    %297 = arith.mulf %292, %296 : vector<16x32xf32>
    %298 = arith.truncf %297 : vector<16x32xf32> to vector<16x32xbf16>
    %c0_103 = arith.constant 0 : index
    %c0_104 = arith.constant 0 : index
    %299 = vector.load %arg3[%c0_103, %c0_104] : memref<32x128xbf16, #tpu.memory_space<vmem>>, vector<32x128xbf16>
    %cst_105 = arith.constant dense<0.000000e+00> : vector<16x128xf32>
    %300 = tpu.matmul %298, %299, %cst_105 {dimension_numbers = #tpu.dot_dimension_numbers<[1], [0], [0], [1], [0, 0, 1, 1], [], []>} : vector<16x32xbf16>, vector<32x128xbf16>, vector<16x128xf32> -> vector<16x128xf32>
    %c0_106 = arith.constant 0 : index
    %c0_107 = arith.constant 0 : index
    %301 = vector.load %arg5[%c0_106, %c0_107] : memref<32x128xbf16, #tpu.memory_space<vmem>>, vector<32x128xbf16>
    %cst_108 = arith.constant dense<0.000000e+00> : vector<16x128xf32>
    %302 = tpu.matmul %298, %301, %cst_108 {dimension_numbers = #tpu.dot_dimension_numbers<[1], [0], [0], [1], [0, 0, 1, 1], [], []>} : vector<16x32xbf16>, vector<32x128xbf16>, vector<16x128xf32> -> vector<16x128xf32>
    %303 = arith.truncf %273 : vector<16x32xf32> to vector<16x32xbf16>
    %c0_109 = arith.constant 0 : index
    %c0_110 = arith.constant 0 : index
    %304 = vector.load %arg6[%c0_109, %c0_110] : memref<32x128xbf16, #tpu.memory_space<vmem>>, vector<32x128xbf16>
    %cst_111 = arith.constant dense<0.000000e+00> : vector<16x128xf32>
    %305 = tpu.matmul %303, %304, %cst_111 {dimension_numbers = #tpu.dot_dimension_numbers<[1], [0], [0], [1], [0, 0, 1, 1], [], []>} : vector<16x32xbf16>, vector<32x128xbf16>, vector<16x128xf32> -> vector<16x128xf32>
    %306 = arith.addf %302, %305 : vector<16x128xf32>
    %307 = arith.addf %306, %12 : vector<16x128xf32>
    %308 = vector.extract_strided_slice %307 {offsets = [0, 0], sizes = [16, 96], strides = [1, 1]} : vector<16x128xf32> to vector<16x96xf32>
    %cst_112 = arith.constant 5.000000e-01 : f32
    %309 = vector.broadcast %cst_112 : f32 to vector<16x96xf32>
    %310 = arith.mulf %309, %308 : vector<16x96xf32>
    %311 = math.tanh %310 : vector<16x96xf32>
    %cst_113 = arith.constant 1.000000e+00 : f32
    %312 = vector.broadcast %cst_113 : f32 to vector<16x96xf32>
    %313 = arith.addf %311, %312 : vector<16x96xf32>
    %cst_114 = arith.constant 5.000000e-01 : f32
    %314 = vector.broadcast %cst_114 : f32 to vector<16x96xf32>
    %315 = arith.mulf %314, %313 : vector<16x96xf32>
    %316 = vector.extract_strided_slice %307 {offsets = [0, 96], sizes = [16, 32], strides = [1, 1]} : vector<16x128xf32> to vector<16x32xf32>
    %317 = math.tanh %316 : vector<16x32xf32>
    %318 = vector.extract_strided_slice %315 {offsets = [0, 0], sizes = [16, 32], strides = [1, 1]} : vector<16x96xf32> to vector<16x32xf32>
    %319 = vector.extract_strided_slice %315 {offsets = [0, 32], sizes = [16, 32], strides = [1, 1]} : vector<16x96xf32> to vector<16x32xf32>
    %320 = vector.extract_strided_slice %315 {offsets = [0, 64], sizes = [16, 32], strides = [1, 1]} : vector<16x96xf32> to vector<16x32xf32>
    %321 = arith.mulf %319, %271 : vector<16x32xf32>
    %322 = arith.mulf %318, %317 : vector<16x32xf32>
    %323 = arith.addf %321, %322 : vector<16x32xf32>
    %324 = math.tanh %323 : vector<16x32xf32>
    %325 = arith.mulf %320, %324 : vector<16x32xf32>
    %326 = arith.addf %274, %325 : vector<16x32xf32>
    %c6_i32 = arith.constant 6 : i32
    %327 = arith.index_cast %c6_i32 : i32 to index
    %c0_115 = arith.constant 0 : index
    %c0_116 = arith.constant 0 : index
    %328 = vector.load %arg11[%327, %c0_115, %c0_116] : memref<8x16x128xbf16, #tpu.memory_space<vmem>>, vector<1x16x128xbf16>
    %329 = vector.shape_cast %328 : vector<1x16x128xbf16> to vector<16x128xbf16>
    %330 = arith.extf %329 : vector<16x128xbf16> to vector<16x128xf32>
    %331 = arith.addf %330, %300 : vector<16x128xf32>
    %332 = vector.extract_strided_slice %331 {offsets = [0, 0], sizes = [16, 96], strides = [1, 1]} : vector<16x128xf32> to vector<16x96xf32>
    %cst_117 = arith.constant 5.000000e-01 : f32
    %333 = vector.broadcast %cst_117 : f32 to vector<16x96xf32>
    %334 = arith.mulf %333, %332 : vector<16x96xf32>
    %335 = math.tanh %334 : vector<16x96xf32>
    %cst_118 = arith.constant 1.000000e+00 : f32
    %336 = vector.broadcast %cst_118 : f32 to vector<16x96xf32>
    %337 = arith.addf %335, %336 : vector<16x96xf32>
    %cst_119 = arith.constant 5.000000e-01 : f32
    %338 = vector.broadcast %cst_119 : f32 to vector<16x96xf32>
    %339 = arith.mulf %338, %337 : vector<16x96xf32>
    %340 = vector.extract_strided_slice %331 {offsets = [0, 96], sizes = [16, 32], strides = [1, 1]} : vector<16x128xf32> to vector<16x32xf32>
    %341 = math.tanh %340 : vector<16x32xf32>
    %342 = vector.extract_strided_slice %339 {offsets = [0, 0], sizes = [16, 32], strides = [1, 1]} : vector<16x96xf32> to vector<16x32xf32>
    %343 = vector.extract_strided_slice %339 {offsets = [0, 32], sizes = [16, 32], strides = [1, 1]} : vector<16x96xf32> to vector<16x32xf32>
    %344 = vector.extract_strided_slice %339 {offsets = [0, 64], sizes = [16, 32], strides = [1, 1]} : vector<16x96xf32> to vector<16x32xf32>
    %345 = arith.mulf %343, %295 : vector<16x32xf32>
    %346 = arith.mulf %342, %341 : vector<16x32xf32>
    %347 = arith.addf %345, %346 : vector<16x32xf32>
    %348 = math.tanh %347 : vector<16x32xf32>
    %349 = arith.mulf %344, %348 : vector<16x32xf32>
    %350 = arith.truncf %349 : vector<16x32xf32> to vector<16x32xbf16>
    %c0_120 = arith.constant 0 : index
    %c0_121 = arith.constant 0 : index
    %351 = vector.load %arg3[%c0_120, %c0_121] : memref<32x128xbf16, #tpu.memory_space<vmem>>, vector<32x128xbf16>
    %cst_122 = arith.constant dense<0.000000e+00> : vector<16x128xf32>
    %352 = tpu.matmul %350, %351, %cst_122 {dimension_numbers = #tpu.dot_dimension_numbers<[1], [0], [0], [1], [0, 0, 1, 1], [], []>} : vector<16x32xbf16>, vector<32x128xbf16>, vector<16x128xf32> -> vector<16x128xf32>
    %c0_123 = arith.constant 0 : index
    %c0_124 = arith.constant 0 : index
    %353 = vector.load %arg5[%c0_123, %c0_124] : memref<32x128xbf16, #tpu.memory_space<vmem>>, vector<32x128xbf16>
    %cst_125 = arith.constant dense<0.000000e+00> : vector<16x128xf32>
    %354 = tpu.matmul %350, %353, %cst_125 {dimension_numbers = #tpu.dot_dimension_numbers<[1], [0], [0], [1], [0, 0, 1, 1], [], []>} : vector<16x32xbf16>, vector<32x128xbf16>, vector<16x128xf32> -> vector<16x128xf32>
    %355 = arith.truncf %325 : vector<16x32xf32> to vector<16x32xbf16>
    %c0_126 = arith.constant 0 : index
    %c0_127 = arith.constant 0 : index
    %356 = vector.load %arg6[%c0_126, %c0_127] : memref<32x128xbf16, #tpu.memory_space<vmem>>, vector<32x128xbf16>
    %cst_128 = arith.constant dense<0.000000e+00> : vector<16x128xf32>
    %357 = tpu.matmul %355, %356, %cst_128 {dimension_numbers = #tpu.dot_dimension_numbers<[1], [0], [0], [1], [0, 0, 1, 1], [], []>} : vector<16x32xbf16>, vector<32x128xbf16>, vector<16x128xf32> -> vector<16x128xf32>
    %358 = arith.addf %354, %357 : vector<16x128xf32>
    %359 = arith.addf %358, %12 : vector<16x128xf32>
    %360 = vector.extract_strided_slice %359 {offsets = [0, 0], sizes = [16, 96], strides = [1, 1]} : vector<16x128xf32> to vector<16x96xf32>
    %cst_129 = arith.constant 5.000000e-01 : f32
    %361 = vector.broadcast %cst_129 : f32 to vector<16x96xf32>
    %362 = arith.mulf %361, %360 : vector<16x96xf32>
    %363 = math.tanh %362 : vector<16x96xf32>
    %cst_130 = arith.constant 1.000000e+00 : f32
    %364 = vector.broadcast %cst_130 : f32 to vector<16x96xf32>
    %365 = arith.addf %363, %364 : vector<16x96xf32>
    %cst_131 = arith.constant 5.000000e-01 : f32
    %366 = vector.broadcast %cst_131 : f32 to vector<16x96xf32>
    %367 = arith.mulf %366, %365 : vector<16x96xf32>
    %368 = vector.extract_strided_slice %359 {offsets = [0, 96], sizes = [16, 32], strides = [1, 1]} : vector<16x128xf32> to vector<16x32xf32>
    %369 = math.tanh %368 : vector<16x32xf32>
    %370 = vector.extract_strided_slice %367 {offsets = [0, 0], sizes = [16, 32], strides = [1, 1]} : vector<16x96xf32> to vector<16x32xf32>
    %371 = vector.extract_strided_slice %367 {offsets = [0, 32], sizes = [16, 32], strides = [1, 1]} : vector<16x96xf32> to vector<16x32xf32>
    %372 = vector.extract_strided_slice %367 {offsets = [0, 64], sizes = [16, 32], strides = [1, 1]} : vector<16x96xf32> to vector<16x32xf32>
    %373 = arith.mulf %371, %323 : vector<16x32xf32>
    %374 = arith.mulf %370, %369 : vector<16x32xf32>
    %375 = arith.addf %373, %374 : vector<16x32xf32>
    %376 = math.tanh %375 : vector<16x32xf32>
    %377 = arith.mulf %372, %376 : vector<16x32xf32>
    %378 = arith.addf %326, %377 : vector<16x32xf32>
    %c7_i32 = arith.constant 7 : i32
    %379 = arith.index_cast %c7_i32 : i32 to index
    %c0_132 = arith.constant 0 : index
    %c0_133 = arith.constant 0 : index
    %380 = vector.load %arg11[%379, %c0_132, %c0_133] : memref<8x16x128xbf16, #tpu.memory_space<vmem>>, vector<1x16x128xbf16>
    %381 = vector.shape_cast %380 : vector<1x16x128xbf16> to vector<16x128xbf16>
    %382 = arith.extf %381 : vector<16x128xbf16> to vector<16x128xf32>
    %383 = arith.addf %382, %352 : vector<16x128xf32>
    %384 = vector.extract_strided_slice %383 {offsets = [0, 0], sizes = [16, 96], strides = [1, 1]} : vector<16x128xf32> to vector<16x96xf32>
    %cst_134 = arith.constant 5.000000e-01 : f32
    %385 = vector.broadcast %cst_134 : f32 to vector<16x96xf32>
    %386 = arith.mulf %385, %384 : vector<16x96xf32>
    %387 = math.tanh %386 : vector<16x96xf32>
    %cst_135 = arith.constant 1.000000e+00 : f32
    %388 = vector.broadcast %cst_135 : f32 to vector<16x96xf32>
    %389 = arith.addf %387, %388 : vector<16x96xf32>
    %cst_136 = arith.constant 5.000000e-01 : f32
    %390 = vector.broadcast %cst_136 : f32 to vector<16x96xf32>
    %391 = arith.mulf %390, %389 : vector<16x96xf32>
    %392 = vector.extract_strided_slice %383 {offsets = [0, 96], sizes = [16, 32], strides = [1, 1]} : vector<16x128xf32> to vector<16x32xf32>
    %393 = math.tanh %392 : vector<16x32xf32>
    %394 = vector.extract_strided_slice %391 {offsets = [0, 0], sizes = [16, 32], strides = [1, 1]} : vector<16x96xf32> to vector<16x32xf32>
    %395 = vector.extract_strided_slice %391 {offsets = [0, 32], sizes = [16, 32], strides = [1, 1]} : vector<16x96xf32> to vector<16x32xf32>
    %396 = vector.extract_strided_slice %391 {offsets = [0, 64], sizes = [16, 32], strides = [1, 1]} : vector<16x96xf32> to vector<16x32xf32>
    %397 = arith.mulf %395, %347 : vector<16x32xf32>
    %398 = arith.mulf %394, %393 : vector<16x32xf32>
    %399 = arith.addf %397, %398 : vector<16x32xf32>
    %400 = math.tanh %399 : vector<16x32xf32>
    %401 = arith.mulf %396, %400 : vector<16x32xf32>
    %402 = arith.truncf %401 : vector<16x32xf32> to vector<16x32xbf16>
    %c0_137 = arith.constant 0 : index
    %c0_138 = arith.constant 0 : index
    %403 = vector.load %arg3[%c0_137, %c0_138] : memref<32x128xbf16, #tpu.memory_space<vmem>>, vector<32x128xbf16>
    %cst_139 = arith.constant dense<0.000000e+00> : vector<16x128xf32>
    %404 = tpu.matmul %402, %403, %cst_139 {dimension_numbers = #tpu.dot_dimension_numbers<[1], [0], [0], [1], [0, 0, 1, 1], [], []>} : vector<16x32xbf16>, vector<32x128xbf16>, vector<16x128xf32> -> vector<16x128xf32>
    %c0_140 = arith.constant 0 : index
    %c0_141 = arith.constant 0 : index
    %405 = vector.load %arg5[%c0_140, %c0_141] : memref<32x128xbf16, #tpu.memory_space<vmem>>, vector<32x128xbf16>
    %cst_142 = arith.constant dense<0.000000e+00> : vector<16x128xf32>
    %406 = tpu.matmul %402, %405, %cst_142 {dimension_numbers = #tpu.dot_dimension_numbers<[1], [0], [0], [1], [0, 0, 1, 1], [], []>} : vector<16x32xbf16>, vector<32x128xbf16>, vector<16x128xf32> -> vector<16x128xf32>
    %407 = arith.truncf %377 : vector<16x32xf32> to vector<16x32xbf16>
    %c0_143 = arith.constant 0 : index
    %c0_144 = arith.constant 0 : index
    %408 = vector.load %arg6[%c0_143, %c0_144] : memref<32x128xbf16, #tpu.memory_space<vmem>>, vector<32x128xbf16>
    %cst_145 = arith.constant dense<0.000000e+00> : vector<16x128xf32>
    %409 = tpu.matmul %407, %408, %cst_145 {dimension_numbers = #tpu.dot_dimension_numbers<[1], [0], [0], [1], [0, 0, 1, 1], [], []>} : vector<16x32xbf16>, vector<32x128xbf16>, vector<16x128xf32> -> vector<16x128xf32>
    %410 = arith.addf %406, %409 : vector<16x128xf32>
    %411 = arith.addf %410, %12 : vector<16x128xf32>
    %412 = vector.extract_strided_slice %411 {offsets = [0, 0], sizes = [16, 96], strides = [1, 1]} : vector<16x128xf32> to vector<16x96xf32>
    %cst_146 = arith.constant 5.000000e-01 : f32
    %413 = vector.broadcast %cst_146 : f32 to vector<16x96xf32>
    %414 = arith.mulf %413, %412 : vector<16x96xf32>
    %415 = math.tanh %414 : vector<16x96xf32>
    %cst_147 = arith.constant 1.000000e+00 : f32
    %416 = vector.broadcast %cst_147 : f32 to vector<16x96xf32>
    %417 = arith.addf %415, %416 : vector<16x96xf32>
    %cst_148 = arith.constant 5.000000e-01 : f32
    %418 = vector.broadcast %cst_148 : f32 to vector<16x96xf32>
    %419 = arith.mulf %418, %417 : vector<16x96xf32>
    %420 = vector.extract_strided_slice %411 {offsets = [0, 96], sizes = [16, 32], strides = [1, 1]} : vector<16x128xf32> to vector<16x32xf32>
    %421 = math.tanh %420 : vector<16x32xf32>
    %422 = vector.extract_strided_slice %419 {offsets = [0, 0], sizes = [16, 32], strides = [1, 1]} : vector<16x96xf32> to vector<16x32xf32>
    %423 = vector.extract_strided_slice %419 {offsets = [0, 32], sizes = [16, 32], strides = [1, 1]} : vector<16x96xf32> to vector<16x32xf32>
    %424 = vector.extract_strided_slice %419 {offsets = [0, 64], sizes = [16, 32], strides = [1, 1]} : vector<16x96xf32> to vector<16x32xf32>
    %425 = arith.mulf %423, %375 : vector<16x32xf32>
    %426 = arith.mulf %422, %421 : vector<16x32xf32>
    %427 = arith.addf %425, %426 : vector<16x32xf32>
    %428 = math.tanh %427 : vector<16x32xf32>
    %429 = arith.mulf %424, %428 : vector<16x32xf32>
    %430 = arith.addf %378, %429 : vector<16x32xf32>
    %c8_i32 = arith.constant 8 : i32
    %cst_149 = arith.constant 1.250000e-01 : f32
    %431 = vector.broadcast %cst_149 : f32 to vector<16x32xf32>
    %432 = arith.mulf %430, %431 : vector<16x32xf32>
    %c0_150 = arith.constant 0 : index
    %c0_151 = arith.constant 0 : index
    %433 = vector.load %arg8[%c0_150, %c0_151] : memref<16x32xf32, #tpu.memory_space<vmem>>, vector<16x32xf32>
    %434 = arith.mulf %433, %432 : vector<16x32xf32>
    %cst_152 = arith.constant dense<0.000000e+00> : vector<16xf32>
    %435 = vector.multi_reduction <add>, %434, %cst_152 [1] : vector<16x32xf32> to vector<16xf32>
    %436 = vector.shape_cast %435 : vector<16xf32> to vector<16x1xf32>
    %c0_153 = arith.constant 0 : index
    %c0_154 = arith.constant 0 : index
    %437 = vector.load %arg9[%c0_153, %c0_154] : memref<16x1xf32, #tpu.memory_space<vmem>>, vector<16x1xf32>
    %438 = arith.addf %436, %437 : vector<16x1xf32>
    %c0_155 = arith.constant 0 : index
    %c0_156 = arith.constant 0 : index
    %439 = vector.load %arg10[%c0_155, %c0_156] : memref<16x1xf32, #tpu.memory_space<vmem>>, vector<16x1xf32>
    tpu.vector_store %arg10[%c0_155, %c0_156], %438 {strides = array<i32>} : memref<16x1xf32, #tpu.memory_space<vmem>>, vector<16x1xf32>,
    return
  }
  func.func @transform_0(%arg0: i32) -> (i32, i32, i32) {
    %c0_i32 = arith.constant 0 : i32
    %c0_i32_0 = arith.constant 0 : i32
    %c0_i32_1 = arith.constant 0 : i32
    return %c0_i32, %arg0, %c0_i32_0 : i32, i32, i32
  }
  func.func @transform_1(%arg0: i32) -> (i32, i32) {
    %c0_i32 = arith.constant 0 : i32
    %c0_i32_0 = arith.constant 0 : i32
    %c0_i32_1 = arith.constant 0 : i32
    return %c0_i32, %c0_i32_0 : i32, i32
  }
  func.func @transform_2(%arg0: i32) -> (i32, i32) {
    %c0_i32 = arith.constant 0 : i32
    %c0_i32_0 = arith.constant 0 : i32
    %c0_i32_1 = arith.constant 0 : i32
    return %c0_i32, %c0_i32_0 : i32, i32
  }
  func.func @transform_3(%arg0: i32) -> (i32, i32) {
    %c0_i32 = arith.constant 0 : i32
    %c0_i32_0 = arith.constant 0 : i32
    %c0_i32_1 = arith.constant 0 : i32
    return %c0_i32, %c0_i32_0 : i32, i32
  }
  func.func @transform_4(%arg0: i32) -> (i32, i32) {
    %c0_i32 = arith.constant 0 : i32
    %c0_i32_0 = arith.constant 0 : i32
    %c0_i32_1 = arith.constant 0 : i32
    return %c0_i32, %c0_i32_0 : i32, i32
  }
  func.func @transform_5(%arg0: i32) -> (i32, i32) {
    %c0_i32 = arith.constant 0 : i32
    %c0_i32_0 = arith.constant 0 : i32
    %c0_i32_1 = arith.constant 0 : i32
    return %c0_i32, %c0_i32_0 : i32, i32
  }
  func.func @transform_6(%arg0: i32) -> (i32, i32) {
    %c0_i32 = arith.constant 0 : i32
    %c0_i32_0 = arith.constant 0 : i32
    %c0_i32_1 = arith.constant 0 : i32
    return %c0_i32, %c0_i32_0 : i32, i32
  }
  func.func @transform_7(%arg0: i32) -> (i32, i32) {
    %c0_i32 = arith.constant 0 : i32
    %c0_i32_0 = arith.constant 0 : i32
    return %arg0, %c0_i32 : i32, i32
  }
  func.func @transform_8(%arg0: i32) -> (i32, i32) {
    %c0_i32 = arith.constant 0 : i32
    %c0_i32_0 = arith.constant 0 : i32
    return %arg0, %c0_i32 : i32, i32
  }
  func.func @transform_9(%arg0: i32) -> (i32, i32) {
    %c0_i32 = arith.constant 0 : i32
    %c0_i32_0 = arith.constant 0 : i32
    return %arg0, %c0_i32 : i32, i32
  }
}

</mosaic_0001>

<llo_original>
// kernel: tpu_custom_call.1
$region0: #{tpu_custom_call.1}
  #allocation0 [shape = 'u32[]', space=smem, size = 0x4, offset = 0x4, fixed_abs, tag = 'smem constant byte address 0x4 - core index']
  #allocation1 [shape = 'u32[72,128]{1,0:T(1,128)}', space=vmem, size = 0x9000, scoped, tag = 'internal scratch']
  #allocation2 [shape = 'bf16[8,16,128]{2,1,0:T(8,128)(2,1)}', space=vmem, size = 0x8000, scoped, tag = 'scratch operand']
  %s0 = inlined_call_operand.hbm [shape: bf16[8,16,32], index: 0, kind: input, shape index: {}]
  %s1 = inlined_call_operand.vmem [shape: bf16[32,128], index: 1, kind: input, shape index: {}]
  %s2 = inlined_call_operand.hbm [shape: bf16[32,128], index: 2, kind: input, shape index: {}]
  %s3 = inlined_call_operand.vmem [shape: f32[1,128], index: 3, kind: input, shape index: {}]
  %s4 = inlined_call_operand.hbm [shape: bf16[32,128], index: 4, kind: input, shape index: {}]
  %s5 = inlined_call_operand.hbm [shape: bf16[32,128], index: 5, kind: input, shape index: {}]
  %s6 = inlined_call_operand.vmem [shape: f32[1,128], index: 6, kind: input, shape index: {}]
  %s7 = inlined_call_operand.hbm [shape: f32[16,32], index: 7, kind: input, shape index: {}]
  %s8 = inlined_call_operand.vmem [shape: f32[16,1], index: 8, kind: input, shape index: {}]
  %s9 = inlined_call_operand.vmem [shape: f32[16,1], index: 9, kind: output, shape index: {}]
  %s10 = sld [smem:[#allocation0]]
  $region66: #{tpu_custom_call.1} parent=0
    _
  %s12 = ssub.s32 1, %s10
  %s13 = scalar_select 0, %s12, %s10
  $region1: #{tpu_custom_call.1} parent=0
    #allocation3 [shape = 'u8[32768]{0}', space=vmem, size = 0x8000, scoped, tag = 'input window, operand 0, single buffered']
    #allocation4 [shape = 's32[1]{0}', space=sflag, size = 0x4, scoped, tag = 'scoped memory for tpu_custom_call.1']
    #allocation5 [shape = 'u8[8192]{0}', space=vmem, size = 0x2000, scoped, tag = 'input window, operand 2, single buffered']
    #allocation6 [shape = 's32[1]{0}', space=sflag, size = 0x4, scoped, tag = 'scoped memory for tpu_custom_call.1']
    #allocation7 [shape = 'u8[8192]{0}', space=vmem, size = 0x2000, scoped, tag = 'input window, operand 4, single buffered']
    #allocation8 [shape = 'u8[8192]{0}', space=vmem, size = 0x2000, scoped, tag = 'input window, operand 5, single buffered']
    #allocation9 [shape = 's32[1]{0}', space=sflag, size = 0x4, scoped, tag = 'scoped memory for tpu_custom_call.1']
    #allocation10 [shape = 'u8[8192]{0}', space=vmem, size = 0x2000, scoped, tag = 'input window, operand 7, single buffered']
    %14 = vsyncpa [#allocation4], 0
    %15 = vsyncpa [#allocation6], 0
    %16 = vsyncpa [#allocation9], 0
    // Predicated region
    $region2: #{tpu_custom_call.1} parent=1 // pred_check
      _
    $region3: #{tpu_custom_call.1} parent=1 // pred_check_branch
      %18 = sbr.rel (0) target = $region5
    $region4: #{tpu_custom_call.1} parent=1 // pred_region
      %20 = vsyncadd [#allocation4], 0
      %s21 = sshll.u32 %s0, 4
      %s22 = int_to_ptr.hbm [resolvable:$true] %s21
      %s23 = sshll.u32 [#allocation3], 4
      %s24 = int_to_ptr.vmem [resolvable:$true] %s23
      %29 = dma.hbm_to_vmem [thread:$0]  %s22, 1024, %s24, [#allocation4], 64, 64, 4
    $region5: #{tpu_custom_call.1} parent=1 // pred_fallthru
      _
    // Predicated region
    $region6: #{tpu_custom_call.1} parent=1 // pred_check
      _
    $region7: #{tpu_custom_call.1} parent=1 // pred_check_branch
      %31 = sbr.rel (0) target = $region9
    $region8: #{tpu_custom_call.1} parent=1 // pred_region
      _
    $region9: #{tpu_custom_call.1} parent=1 // pred_fallthru
      _
    // Predicated region
    $region10: #{tpu_custom_call.1} parent=1 // pred_check
      _
    $region11: #{tpu_custom_call.1} parent=1 // pred_check_branch
      %33 = sbr.rel (0) target = $region13
    $region12: #{tpu_custom_call.1} parent=1 // pred_region
      %35 = vsyncadd [#allocation6], 0
      %s36 = sshll.u32 %s2, 4
      %s37 = int_to_ptr.hbm [resolvable:$true] %s36
      %s38 = sshll.u32 [#allocation5], 4
      %s39 = int_to_ptr.vmem [resolvable:$true] %s38
      %44 = dma.hbm_to_vmem [thread:$0]  %s37, 256, %s39, [#allocation6], 64, 64, 4
    $region13: #{tpu_custom_call.1} parent=1 // pred_fallthru
      _
    // Predicated region
    $region14: #{tpu_custom_call.1} parent=1 // pred_check
      _
    $region15: #{tpu_custom_call.1} parent=1 // pred_check_branch
      %46 = sbr.rel (0) target = $region17
    $region16: #{tpu_custom_call.1} parent=1 // pred_region
      _
    $region17: #{tpu_custom_call.1} parent=1 // pred_fallthru
      _
    // Predicated region
    $region18: #{tpu_custom_call.1} parent=1 // pred_check
      _
    $region19: #{tpu_custom_call.1} parent=1 // pred_check_branch
      %48 = sbr.rel (0) target = $region21
    $region20: #{tpu_custom_call.1} parent=1 // pred_region
      %50 = vsyncadd [#allocation6], 0
      %s51 = sshll.u32 %s4, 4
      %s52 = int_to_ptr.hbm [resolvable:$true] %s51
      %s53 = sshll.u32 [#allocation7], 4
      %s54 = int_to_ptr.vmem [resolvable:$true] %s53
      %59 = dma.hbm_to_vmem [thread:$0]  %s52, 256, %s54, [#allocation6], 64, 64, 4
    $region21: #{tpu_custom_call.1} parent=1 // pred_fallthru
      _
    // Predicated region
    $region22: #{tpu_custom_call.1} parent=1 // pred_check
      _
    $region23: #{tpu_custom_call.1} parent=1 // pred_check_branch
      %61 = sbr.rel (0) target = $region25
    $region24: #{tpu_custom_call.1} parent=1 // pred_region
      %63 = vsyncadd [#allocation9], 0
      %s64 = sshll.u32 %s5, 4
      %s65 = int_to_ptr.hbm [resolvable:$true] %s64
      %s66 = sshll.u32 [#allocation8], 4
      %s67 = int_to_ptr.vmem [resolvable:$true] %s66
      %72 = dma.hbm_to_vmem [thread:$0]  %s65, 256, %s67, [#allocation9], 64, 64, 4
    $region25: #{tpu_custom_call.1} parent=1 // pred_fallthru
      _
    // Predicated region
    $region26: #{tpu_custom_call.1} parent=1 // pred_check
      _
    $region27: #{tpu_custom_call.1} parent=1 // pred_check_branch
      %74 = sbr.rel (0) target = $region29
    $region28: #{tpu_custom_call.1} parent=1 // pred_region
      _
    $region29: #{tpu_custom_call.1} parent=1 // pred_fallthru
      _
    // Predicated region
    $region30: #{tpu_custom_call.1} parent=1 // pred_check
      _
    $region31: #{tpu_custom_call.1} parent=1 // pred_check_branch
      %76 = sbr.rel (0) target = $region33
    $region32: #{tpu_custom_call.1} parent=1 // pred_region
      %78 = vsyncadd [#allocation9], 0
      %s79 = sshll.u32 %s7, 4
      %s80 = int_to_ptr.hbm [resolvable:$true] %s79
      %s81 = sshll.u32 [#allocation10], 4
      %s82 = int_to_ptr.vmem [resolvable:$true] %s81
      %87 = dma.hbm_to_vmem [thread:$0]  %s80, 256, %s82, [#allocation9], 128, 128, 8
    $region33: #{tpu_custom_call.1} parent=1 // pred_fallthru
      _
    // Predicated region
    $region34: #{tpu_custom_call.1} parent=1 // pred_check
      _
    $region35: #{tpu_custom_call.1} parent=1 // pred_check_branch
      %89 = sbr.rel (0) target = $region37
    $region36: #{tpu_custom_call.1} parent=1 // pred_region
      _
    $region37: #{tpu_custom_call.1} parent=1 // pred_fallthru
      _
    // Predicated region
    $region38: #{tpu_custom_call.1} parent=1 // pred_check
      _
    $region39: #{tpu_custom_call.1} parent=1 // pred_check_branch
      %91 = sbr.rel (0) target = $region41
    $region40: #{tpu_custom_call.1} parent=1 // pred_region
      %93 = dma.done [#allocation4], 1024
    $region41: #{tpu_custom_call.1} parent=1 // pred_fallthru
      _
    // Predicated region
    $region42: #{tpu_custom_call.1} parent=1 // pred_check
      _
    $region43: #{tpu_custom_call.1} parent=1 // pred_check_branch
      %95 = sbr.rel (0) target = $region45
    $region44: #{tpu_custom_call.1} parent=1 // pred_region
      %97 = dma.done [#allocation6], 256
    $region45: #{tpu_custom_call.1} parent=1 // pred_fallthru
      _
    // Predicated region
    $region46: #{tpu_custom_call.1} parent=1 // pred_check
      _
    $region47: #{tpu_custom_call.1} parent=1 // pred_check_branch
      %99 = sbr.rel (0) target = $region49
    $region48: #{tpu_custom_call.1} parent=1 // pred_region
      %101 = dma.done [#allocation6], 256
    $region49: #{tpu_custom_call.1} parent=1 // pred_fallthru
      _
    // Predicated region
    $region50: #{tpu_custom_call.1} parent=1 // pred_check
      _
    $region51: #{tpu_custom_call.1} parent=1 // pred_check_branch
      %103 = sbr.rel (0) target = $region53
    $region52: #{tpu_custom_call.1} parent=1 // pred_region
      %105 = dma.done [#allocation9], 256
    $region53: #{tpu_custom_call.1} parent=1 // pred_fallthru
      _
    // Predicated region
    $region54: #{tpu_custom_call.1} parent=1 // pred_check
      _
    $region55: #{tpu_custom_call.1} parent=1 // pred_check_branch
      %107 = sbr.rel (0) target = $region57
    $region56: #{tpu_custom_call.1} parent=1 // pred_region
      %109 = dma.done [#allocation9], 256
    $region57: #{tpu_custom_call.1} parent=1 // pred_fallthru
      _
    %v111 = vld [vmem:[#allocation3] sm:$0xf]
    %v112 = vld [vmem:[#allocation3 + $0x4] sm:$0xf]
    %v113 = vld [vmem:[#allocation3 + $0x8] sm:$0xf]
    %v114 = vld [vmem:[#allocation3 + $0xc] sm:$0xf]
    %v115 = vld [vmem:[#allocation3 + $0x10] sm:$0xf]
    %v116 = vld [vmem:[#allocation3 + $0x14] sm:$0xf]
    %v117 = vld [vmem:[#allocation3 + $0x18] sm:$0xf]
    %v118 = vld [vmem:[#allocation3 + $0x1c] sm:$0xf]
    %v119 = vld [vmem:[#allocation3 + $0x20] sm:$0xf]
    %v120 = vld [vmem:[#allocation3 + $0x24] sm:$0xf]
    %v121 = vld [vmem:[#allocation3 + $0x28] sm:$0xf]
    %v122 = vld [vmem:[#allocation3 + $0x2c] sm:$0xf]
    %v123 = vld [vmem:[#allocation3 + $0x30] sm:$0xf]
    %v124 = vld [vmem:[#allocation3 + $0x34] sm:$0xf]
    %v125 = vld [vmem:[#allocation3 + $0x38] sm:$0xf]
    %v126 = vld [vmem:[#allocation3 + $0x3c] sm:$0xf]
    %v127 = vld [vmem:[%s1] sm:$0xf]
    %v128 = vld [vmem:[%s1 + $0x4] sm:$0xf]
    %v129 = vld [vmem:[%s1 + $0x8] sm:$0xf]
    %v130 = vld [vmem:[%s1 + $0xc] sm:$0xf]
    %v131 = vld [vmem:[%s3] sm:$0x1]
    %v133 = vperm.slane %v131, 0
    %v151 = vunpack.c.l.b16 %v111
    %v152 = vunpack.c.l.b16 %v112
    %v153 = vunpack.c.l.b16 %v113
    %v154 = vunpack.c.l.b16 %v114
    %v155 = vunpack.c.l.b16 %v115
    %v156 = vunpack.c.l.b16 %v116
    %v157 = vunpack.c.l.b16 %v117
    %v158 = vunpack.c.l.b16 %v118
    %v159 = vunpack.c.l.b16 %v119
    %v160 = vunpack.c.l.b16 %v120
    %v161 = vunpack.c.l.b16 %v121
    %v162 = vunpack.c.l.b16 %v122
    %v163 = vunpack.c.l.b16 %v123
    %v164 = vunpack.c.l.b16 %v124
    %v165 = vunpack.c.l.b16 %v125
    %v166 = vunpack.c.l.b16 %v126
    %v167 = vpack.c.b16 %v152, %v151
    %v168 = vpack.c.b16 %v154, %v153
    %v169 = vpack.c.b16 %v156, %v155
    %v170 = vpack.c.b16 %v158, %v157
    %v171 = vpack.c.b16 %v160, %v159
    %v172 = vpack.c.b16 %v162, %v161
    %v173 = vpack.c.b16 %v164, %v163
    %v174 = vpack.c.b16 %v166, %v165
    %v179 = vunpack.c.l.b16 %v127
    %v180 = vunpack.c.l.b16 %v128
    %v181 = vunpack.c.l.b16 %v129
    %v182 = vunpack.c.l.b16 %v130
    %v183 = vpack.c.b16 %v180, %v179
    %v184 = vpack.c.b16 %v182, %v181
    %vm187 = vcmask 261120
    %v189 = vsel %vm187, %v167, 0
    %v192 = vsel %vm187, %v168, 0
    %v195 = vsel %vm187, %v169, 0
    %v198 = vsel %vm187, %v170, 0
    %v201 = vsel %vm187, %v171, 0
    %v204 = vsel %vm187, %v172, 0
    %v207 = vsel %vm187, %v173, 0
    %v210 = vsel %vm187, %v174, 0
    %212 = vmatpush.bf16.msra.mxu0 0
    %213 = vmatpush.bf16.msra.mxu0 0
    %214 = vmatpush.bf16.msra.mxu0 0
    %215 = vmatpush.bf16.msra.mxu0 0
    %216 = vmatpush.bf16.msra.mxu0 0
    %217 = vmatpush.bf16.msra.mxu0 0
    %218 = vmatpush.bf16.msra.mxu0 %v184
    %219 = vmatpush.bf16.msra.mxu0 %v183
    %220 = vmatmul.bf16.gmra.mxu0 %v189
    %v221 = vpop.f32.mrf.mxu0
    %v222 = vadd.f32 %v133, %v221
    %v223 = vpop.f32.mrf.mxu0
    %v224 = vadd.f32 %v133, %v223
    %225 = vmatmul.bf16.gmra.mxu0 %v192
    %v226 = vpop.f32.mrf.mxu0
    %v227 = vadd.f32 %v133, %v226
    %v228 = vpop.f32.mrf.mxu0
    %v229 = vadd.f32 %v133, %v228
    %230 = vmatmul.bf16.gmra.mxu0 %v195
    %v231 = vpop.f32.mrf.mxu0
    %v232 = vadd.f32 %v133, %v231
    %v233 = vpop.f32.mrf.mxu0
    %v234 = vadd.f32 %v133, %v233
    %235 = vmatmul.bf16.gmra.mxu0 %v198
    %v236 = vpop.f32.mrf.mxu0
    %v237 = vadd.f32 %v133, %v236
    %v238 = vpop.f32.mrf.mxu0
    %v239 = vadd.f32 %v133, %v238
    %240 = vmatmul.bf16.gmra.mxu0 %v201
    %v241 = vpop.f32.mrf.mxu0
    %v242 = vadd.f32 %v133, %v241
    %v243 = vpop.f32.mrf.mxu0
    %v244 = vadd.f32 %v133, %v243
    %245 = vmatmul.bf16.gmra.mxu0 %v204
    %v246 = vpop.f32.mrf.mxu0
    %v247 = vadd.f32 %v133, %v246
    %v248 = vpop.f32.mrf.mxu0
    %v249 = vadd.f32 %v133, %v248
    %250 = vmatmul.bf16.gmra.mxu0 %v207
    %v251 = vpop.f32.mrf.mxu0
    %v252 = vadd.f32 %v133, %v251
    %v253 = vpop.f32.mrf.mxu0
    %v254 = vadd.f32 %v133, %v253
    %255 = vmatmul.bf16.gmra.mxu0 %v210
    %v256 = vpop.f32.mrf.mxu0
    %v257 = vadd.f32 %v133, %v256
    %v258 = vpop.f32.mrf.mxu0
    %v259 = vadd.f32 %v133, %v258
    %260 = vdwg.mxu0
    %v261 = vpack.c.bf16 %v222, %v222
    %v262 = vpack.c.bf16 %v224, %v224
    %v263 = vpack.c.bf16 %v227, %v227
    %v264 = vpack.c.bf16 %v229, %v229
    %v265 = vpack.c.bf16 %v232, %v232
    %v266 = vpack.c.bf16 %v234, %v234
    %v267 = vpack.c.bf16 %v237, %v237
    %v268 = vpack.c.bf16 %v239, %v239
    %v269 = vpack.c.bf16 %v242, %v242
    %v270 = vpack.c.bf16 %v244, %v244
    %v271 = vpack.c.bf16 %v247, %v247
    %v272 = vpack.c.bf16 %v249, %v249
    %v273 = vpack.c.bf16 %v252, %v252
    %v274 = vpack.c.bf16 %v254, %v254
    %v275 = vpack.c.bf16 %v257, %v257
    %v276 = vpack.c.bf16 %v259, %v259
    %277 = vst [vmem:[#allocation2] sm:$0xf] %v261
    %278 = vst [vmem:[#allocation2 + $0x4] sm:$0xf] %v262
    %279 = vst [vmem:[#allocation2 + $0x8] sm:$0xf] %v263
    %280 = vst [vmem:[#allocation2 + $0xc] sm:$0xf] %v264
    %281 = vst [vmem:[#allocation2 + $0x10] sm:$0xf] %v265
    %282 = vst [vmem:[#allocation2 + $0x14] sm:$0xf] %v266
    %283 = vst [vmem:[#allocation2 + $0x18] sm:$0xf] %v267
    %284 = vst [vmem:[#allocation2 + $0x1c] sm:$0xf] %v268
    %285 = vst [vmem:[#allocation2 + $0x20] sm:$0xf] %v269
    %286 = vst [vmem:[#allocation2 + $0x24] sm:$0xf] %v270
    %287 = vst [vmem:[#allocation2 + $0x28] sm:$0xf] %v271
    %288 = vst [vmem:[#allocation2 + $0x2c] sm:$0xf] %v272
    %289 = vst [vmem:[#allocation2 + $0x30] sm:$0xf] %v273
    %290 = vst [vmem:[#allocation2 + $0x34] sm:$0xf] %v274
    %291 = vst [vmem:[#allocation2 + $0x38] sm:$0xf] %v275
    %292 = vst [vmem:[#allocation2 + $0x3c] sm:$0xf] %v276
    %v293 = vld [vmem:[%s6] sm:$0x1]
    %v295 = vperm.slane %v293, 0
    %v297 = vld [vmem:[#allocation2] sm:$0xf]
    %v298 = vld [vmem:[#allocation2 + $0x4] sm:$0xf]
    %v299 = vunpack.c.l.bf16 %v297
    %v300 = vunpack.c.l.bf16 %v298
    %v301 = vadd.f32 %v299, 0.0
    %v302 = vadd.f32 %v300, 0.0
    %v303 = vmul.f32 %v301, 0.5
    %v304 = vmul.f32 %v302, 0.5
    %v305 = vtanh.pop %v303
    %v306 = vtanh.pop %v304
    %v307 = vadd.f32 %v305, 1.0
    %v308 = vadd.f32 %v306, 1.0
    %v309 = vmul.f32 %v307, 0.5
    %v310 = vmul.f32 %v308, 0.5
    %v311 = vtanh.pop %v301
    %v312 = vtanh.pop %v302
    %v313 = vmul.f32 %v309, 0.0
    %v314 = vmul.f32 %v310, 0.0
    %317 = vrot.lane.b32.xlu0 %v311, 32
    %v318 = vpop.permute.xlu0 %317
    %319 = vrot.lane.b32.xlu0 %v312, 32
    %v320 = vpop.permute.xlu0 %319
    %v323 = vmul.f32 %v309, %v318
    %v324 = vmul.f32 %v310, %v320
    %327 = vrot.lane.b32.xlu0 %v323, 32
    %v328 = vpop.permute.xlu0 %327
    %329 = vrot.lane.b32.xlu0 %v324, 32
    %v330 = vpop.permute.xlu0 %329
    %v333 = vadd.f32 %v313, %v328
    %v334 = vadd.f32 %v314, %v330
    %v335 = vtanh.pop %v333
    %v336 = vtanh.pop %v334
    %339 = vrot.lane.b32.xlu0 %v335, 32
    %v340 = vpop.permute.xlu0 %339
    %341 = vrot.lane.b32.xlu0 %v336, 32
    %v342 = vpop.permute.xlu0 %341
    %v345 = vmul.f32 %v309, %v340
    %v346 = vmul.f32 %v310, %v342
    %v347 = vpack.c.bf16 %v346, %v345
    %v348 = vld [vmem:[#allocation5] sm:$0xf]
    %v349 = vld [vmem:[#allocation5 + $0x4] sm:$0xf]
    %v350 = vld [vmem:[#allocation5 + $0x8] sm:$0xf]
    %v351 = vld [vmem:[#allocation5 + $0xc] sm:$0xf]
    %353 = vrot.lane.b32.xlu0 %v347, 64
    %v354 = vpop.permute.xlu0 %353
    %v359 = vunpack.c.l.b16 %v348
    %v360 = vunpack.c.l.b16 %v349
    %v361 = vunpack.c.l.b16 %v350
    %v362 = vunpack.c.l.b16 %v351
    %v363 = vpack.c.b16 %v360, %v359
    %v364 = vpack.c.b16 %v362, %v361
    %v368 = vsel %vm187, %v354, 0
    %370 = vmatpush.bf16.msra.mxu0 0
    %371 = vmatpush.bf16.msra.mxu0 0
    %372 = vmatpush.bf16.msra.mxu0 0
    %373 = vmatpush.bf16.msra.mxu0 0
    %374 = vmatpush.bf16.msra.mxu0 0
    %375 = vmatpush.bf16.msra.mxu0 0
    %376 = vmatpush.bf16.msra.mxu0 %v364
    %377 = vmatpush.bf16.msra.mxu0 %v363
    %378 = vmatmul.bf16.gmra.mxu0 %v368
    %v379 = vpop.f32.mrf.mxu0
    %v380 = vadd.f32 0.0, %v379
    %v381 = vpop.f32.mrf.mxu0
    %v382 = vadd.f32 0.0, %v381
    %383 = vdwg.mxu0
    %v384 = vld [vmem:[#allocation7] sm:$0xf]
    %v385 = vld [vmem:[#allocation7 + $0x4] sm:$0xf]
    %v386 = vld [vmem:[#allocation7 + $0x8] sm:$0xf]
    %v387 = vld [vmem:[#allocation7 + $0xc] sm:$0xf]
    %v388 = vld [vmem:[#allocation8] sm:$0xf]
    %v389 = vld [vmem:[#allocation8 + $0x4] sm:$0xf]
    %v390 = vld [vmem:[#allocation8 + $0x8] sm:$0xf]
    %v391 = vld [vmem:[#allocation8 + $0xc] sm:$0xf]
    %v396 = vunpack.c.l.b16 %v388
    %v397 = vunpack.c.l.b16 %v389
    %v398 = vunpack.c.l.b16 %v390
    %v399 = vunpack.c.l.b16 %v391
    %v400 = vpack.c.b16 %v397, %v396
    %v401 = vpack.c.b16 %v399, %v398
    %v405 = vsel %vm187, 0, 0
    %407 = vmatpush.bf16.msra.mxu0 0
    %408 = vmatpush.bf16.msra.mxu0 0
    %409 = vmatpush.bf16.msra.mxu0 0
    %410 = vmatpush.bf16.msra.mxu0 0
    %411 = vmatpush.bf16.msra.mxu0 0
    %412 = vmatpush.bf16.msra.mxu0 0
    %413 = vmatpush.bf16.msra.mxu0 %v401
    %414 = vmatpush.bf16.msra.mxu0 %v400
    %415 = vmatmul.bf16.gmra.mxu0 %v405
    %v416 = vpop.f32.mrf.mxu0
    %v417 = vadd.f32 0.0, %v416
    %v418 = vpop.f32.mrf.mxu0
    %v419 = vadd.f32 0.0, %v418
    %420 = vdwg.mxu0
    %v425 = vunpack.c.l.b16 %v384
    %v426 = vunpack.c.l.b16 %v385
    %v427 = vunpack.c.l.b16 %v386
    %v428 = vunpack.c.l.b16 %v387
    %v429 = vpack.c.b16 %v426, %v425
    %v430 = vpack.c.b16 %v428, %v427
    %433 = vmatpush.bf16.msra.mxu0 0
    %434 = vmatpush.bf16.msra.mxu0 0
    %435 = vmatpush.bf16.msra.mxu0 0
    %436 = vmatpush.bf16.msra.mxu0 0
    %437 = vmatpush.bf16.msra.mxu0 0
    %438 = vmatpush.bf16.msra.mxu0 0
    %439 = vmatpush.bf16.msra.mxu0 %v430
    %440 = vmatpush.bf16.msra.mxu0 %v429
    %441 = vmatmul.bf16.gmra.mxu0 %v368
    %v442 = vpop.f32.mrf.mxu0
    %v443 = vadd.f32 %v417, %v442
    %v444 = vpop.f32.mrf.mxu0
    %v445 = vadd.f32 %v419, %v444
    %446 = vdwg.mxu0
    %v447 = vadd.f32 %v443, %v295
    %v448 = vadd.f32 %v445, %v295
    %v449 = vmul.f32 %v447, 0.5
    %v450 = vmul.f32 %v448, 0.5
    %v451 = vtanh.pop %v449
    %v452 = vtanh.pop %v450
    %v453 = vadd.f32 %v451, 1.0
    %v454 = vadd.f32 %v452, 1.0
    %v455 = vmul.f32 %v453, 0.5
    %v456 = vmul.f32 %v454, 0.5
    %v457 = vtanh.pop %v447
    %v458 = vtanh.pop %v448
    %v459 = vmul.f32 %v455, 0.0
    %v460 = vmul.f32 %v456, 0.0
    %463 = vrot.lane.b32.xlu0 %v457, 32
    %v464 = vpop.permute.xlu0 %463
    %465 = vrot.lane.b32.xlu0 %v458, 32
    %v466 = vpop.permute.xlu0 %465
    %v469 = vmul.f32 %v455, %v464
    %v470 = vmul.f32 %v456, %v466
    %473 = vrot.lane.b32.xlu0 %v469, 32
    %v474 = vpop.permute.xlu0 %473
    %475 = vrot.lane.b32.xlu0 %v470, 32
    %v476 = vpop.permute.xlu0 %475
    %v479 = vadd.f32 %v459, %v474
    %v480 = vadd.f32 %v460, %v476
    %v481 = vtanh.pop %v479
    %v482 = vtanh.pop %v480
    %485 = vrot.lane.b32.xlu0 %v481, 32
    %v486 = vpop.permute.xlu0 %485
    %487 = vrot.lane.b32.xlu0 %v482, 32
    %v488 = vpop.permute.xlu0 %487
    %v491 = vmul.f32 %v455, %v486
    %v492 = vmul.f32 %v456, %v488
    %v493 = vadd.f32 %v491, 0.0
    %v494 = vadd.f32 %v492, 0.0
    %s495 = scalar_lea.vmem [#allocation2], 8
    %v496 = vld [vmem:[%s495] sm:$0xf]
    %v497 = vld [vmem:[%s495 + $0x4] sm:$0xf]
    %v498 = vunpack.c.l.bf16 %v496
    %v499 = vunpack.c.l.bf16 %v497
    %v500 = vadd.f32 %v498, %v380
    %v501 = vadd.f32 %v499, %v382
    %v502 = vmul.f32 %v500, 0.5
    %v503 = vmul.f32 %v501, 0.5
    %v504 = vtanh.pop %v502
    %v505 = vtanh.pop %v503
    %v506 = vadd.f32 %v504, 1.0
    %v507 = vadd.f32 %v505, 1.0
    %v508 = vmul.f32 %v506, 0.5
    %v509 = vmul.f32 %v507, 0.5
    %v510 = vtanh.pop %v500
    %v511 = vtanh.pop %v501
    %v512 = vmul.f32 %v508, %v333
    %v513 = vmul.f32 %v509, %v334
    %516 = vrot.lane.b32.xlu0 %v510, 32
    %v517 = vpop.permute.xlu0 %516
    %518 = vrot.lane.b32.xlu0 %v511, 32
    %v519 = vpop.permute.xlu0 %518
    %v522 = vmul.f32 %v508, %v517
    %v523 = vmul.f32 %v509, %v519
    %526 = vrot.lane.b32.xlu0 %v522, 32
    %v527 = vpop.permute.xlu0 %526
    %528 = vrot.lane.b32.xlu0 %v523, 32
    %v529 = vpop.permute.xlu0 %528
    %v532 = vadd.f32 %v512, %v527
    %v533 = vadd.f32 %v513, %v529
    %v534 = vtanh.pop %v532
    %v535 = vtanh.pop %v533
    %538 = vrot.lane.b32.xlu0 %v534, 32
    %v539 = vpop.permute.xlu0 %538
    %540 = vrot.lane.b32.xlu0 %v535, 32
    %v541 = vpop.permute.xlu0 %540
    %v544 = vmul.f32 %v508, %v539
    %v545 = vmul.f32 %v509, %v541
    %v546 = vpack.c.bf16 %v545, %v544
    %548 = vrot.lane.b32.xlu0 %v546, 64
    %v549 = vpop.permute.xlu0 %548
    %v551 = vsel %vm187, %v549, 0
    %553 = vmatpush.bf16.msra.mxu0 0
    %554 = vmatpush.bf16.msra.mxu0 0
    %555 = vmatpush.bf16.msra.mxu0 0
    %556 = vmatpush.bf16.msra.mxu0 0
    %557 = vmatpush.bf16.msra.mxu0 0
    %558 = vmatpush.bf16.msra.mxu0 0
    %559 = vmatpush.bf16.msra.mxu0 %v364
    %560 = vmatpush.bf16.msra.mxu0 %v363
    %561 = vmatmul.bf16.gmra.mxu0 %v551
    %v562 = vpop.f32.mrf.mxu0
    %v563 = vadd.f32 0.0, %v562
    %v564 = vpop.f32.mrf.mxu0
    %v565 = vadd.f32 0.0, %v564
    %566 = vdwg.mxu0
    %v567 = vpack.c.bf16 %v492, %v491
    %569 = vrot.lane.b32.xlu0 %v567, 64
    %v570 = vpop.permute.xlu0 %569
    %v572 = vsel %vm187, %v570, 0
    %574 = vmatpush.bf16.msra.mxu0 0
    %575 = vmatpush.bf16.msra.mxu0 0
    %576 = vmatpush.bf16.msra.mxu0 0
    %577 = vmatpush.bf16.msra.mxu0 0
    %578 = vmatpush.bf16.msra.mxu0 0
    %579 = vmatpush.bf16.msra.mxu0 0
    %580 = vmatpush.bf16.msra.mxu0 %v401
    %581 = vmatpush.bf16.msra.mxu0 %v400
    %582 = vmatmul.bf16.gmra.mxu0 %v572
    %v583 = vpop.f32.mrf.mxu0
    %v584 = vadd.f32 0.0, %v583
    %v585 = vpop.f32.mrf.mxu0
    %v586 = vadd.f32 0.0, %v585
    %587 = vdwg.mxu0
    %588 = vmatpush.bf16.msra.mxu0 0
    %589 = vmatpush.bf16.msra.mxu0 0
    %590 = vmatpush.bf16.msra.mxu0 0
    %591 = vmatpush.bf16.msra.mxu0 0
    %592 = vmatpush.bf16.msra.mxu0 0
    %593 = vmatpush.bf16.msra.mxu0 0
    %594 = vmatpush.bf16.msra.mxu0 %v430
    %595 = vmatpush.bf16.msra.mxu0 %v429
    %596 = vmatmul.bf16.gmra.mxu0 %v551
    %v597 = vpop.f32.mrf.mxu0
    %v598 = vadd.f32 %v584, %v597
    %v599 = vpop.f32.mrf.mxu0
    %v600 = vadd.f32 %v586, %v599
    %601 = vdwg.mxu0
    %v602 = vadd.f32 %v598, %v295
    %v603 = vadd.f32 %v600, %v295
    %v604 = vmul.f32 %v602, 0.5
    %v605 = vmul.f32 %v603, 0.5
    %v606 = vtanh.pop %v604
    %v607 = vtanh.pop %v605
    %v608 = vadd.f32 %v606, 1.0
    %v609 = vadd.f32 %v607, 1.0
    %v610 = vmul.f32 %v608, 0.5
    %v611 = vmul.f32 %v609, 0.5
    %v612 = vtanh.pop %v602
    %v613 = vtanh.pop %v603
    %v614 = vmul.f32 %v610, %v479
    %v615 = vmul.f32 %v611, %v480
    %618 = vrot.lane.b32.xlu0 %v612, 32
    %v619 = vpop.permute.xlu0 %618
    %620 = vrot.lane.b32.xlu0 %v613, 32
    %v621 = vpop.permute.xlu0 %620
    %v624 = vmul.f32 %v610, %v619
    %v625 = vmul.f32 %v611, %v621
    %628 = vrot.lane.b32.xlu0 %v624, 32
    %v629 = vpop.permute.xlu0 %628
    %630 = vrot.lane.b32.xlu0 %v625, 32
    %v631 = vpop.permute.xlu0 %630
    %v634 = vadd.f32 %v614, %v629
    %v635 = vadd.f32 %v615, %v631
    %v636 = vtanh.pop %v634
    %v637 = vtanh.pop %v635
    %640 = vrot.lane.b32.xlu0 %v636, 32
    %v641 = vpop.permute.xlu0 %640
    %642 = vrot.lane.b32.xlu0 %v637, 32
    %v643 = vpop.permute.xlu0 %642
    %v646 = vmul.f32 %v610, %v641
    %v647 = vmul.f32 %v611, %v643
    %v648 = vadd.f32 %v493, %v646
    %v649 = vadd.f32 %v494, %v647
    %s650 = scalar_lea.vmem [#allocation2], 16
    %v651 = vld [vmem:[%s650] sm:$0xf]
    %v652 = vld [vmem:[%s650 + $0x4] sm:$0xf]
    %v653 = vunpack.c.l.bf16 %v651
    %v654 = vunpack.c.l.bf16 %v652
    %v655 = vadd.f32 %v653, %v563
    %v656 = vadd.f32 %v654, %v565
    %v657 = vmul.f32 %v655, 0.5
    %v658 = vmul.f32 %v656, 0.5
    %v659 = vtanh.pop %v657
    %v660 = vtanh.pop %v658
    %v661 = vadd.f32 %v659, 1.0
    %v662 = vadd.f32 %v660, 1.0
    %v663 = vmul.f32 %v661, 0.5
    %v664 = vmul.f32 %v662, 0.5
    %v665 = vtanh.pop %v655
    %v666 = vtanh.pop %v656
    %v667 = vmul.f32 %v663, %v532
    %v668 = vmul.f32 %v664, %v533
    %671 = vrot.lane.b32.xlu0 %v665, 32
    %v672 = vpop.permute.xlu0 %671
    %673 = vrot.lane.b32.xlu0 %v666, 32
    %v674 = vpop.permute.xlu0 %673
    %v677 = vmul.f32 %v663, %v672
    %v678 = vmul.f32 %v664, %v674
    %681 = vrot.lane.b32.xlu0 %v677, 32
    %v682 = vpop.permute.xlu0 %681
    %683 = vrot.lane.b32.xlu0 %v678, 32
    %v684 = vpop.permute.xlu0 %683
    %v687 = vadd.f32 %v667, %v682
    %v688 = vadd.f32 %v668, %v684
    %v689 = vtanh.pop %v687
    %v690 = vtanh.pop %v688
    %693 = vrot.lane.b32.xlu0 %v689, 32
    %v694 = vpop.permute.xlu0 %693
    %695 = vrot.lane.b32.xlu0 %v690, 32
    %v696 = vpop.permute.xlu0 %695
    %v699 = vmul.f32 %v663, %v694
    %v700 = vmul.f32 %v664, %v696
    %v701 = vpack.c.bf16 %v700, %v699
    %703 = vrot.lane.b32.xlu0 %v701, 64
    %v704 = vpop.permute.xlu0 %703
    %v706 = vsel %vm187, %v704, 0
    %708 = vmatpush.bf16.msra.mxu0 0
    %709 = vmatpush.bf16.msra.mxu0 0
    %710 = vmatpush.bf16.msra.mxu0 0
    %711 = vmatpush.bf16.msra.mxu0 0
    %712 = vmatpush.bf16.msra.mxu0 0
    %713 = vmatpush.bf16.msra.mxu0 0
    %714 = vmatpush.bf16.msra.mxu0 %v364
    %715 = vmatpush.bf16.msra.mxu0 %v363
    %716 = vmatmul.bf16.gmra.mxu0 %v706
    %v717 = vpop.f32.mrf.mxu0
    %v718 = vadd.f32 0.0, %v717
    %v719 = vpop.f32.mrf.mxu0
    %v720 = vadd.f32 0.0, %v719
    %721 = vdwg.mxu0
    %v722 = vpack.c.bf16 %v647, %v646
    %724 = vrot.lane.b32.xlu0 %v722, 64
    %v725 = vpop.permute.xlu0 %724
    %v727 = vsel %vm187, %v725, 0
    %729 = vmatpush.bf16.msra.mxu0 0
    %730 = vmatpush.bf16.msra.mxu0 0
    %731 = vmatpush.bf16.msra.mxu0 0
    %732 = vmatpush.bf16.msra.mxu0 0
    %733 = vmatpush.bf16.msra.mxu0 0
    %734 = vmatpush.bf16.msra.mxu0 0
    %735 = vmatpush.bf16.msra.mxu0 %v401
    %736 = vmatpush.bf16.msra.mxu0 %v400
    %737 = vmatmul.bf16.gmra.mxu0 %v727
    %v738 = vpop.f32.mrf.mxu0
    %v739 = vadd.f32 0.0, %v738
    %v740 = vpop.f32.mrf.mxu0
    %v741 = vadd.f32 0.0, %v740
    %742 = vdwg.mxu0
    %743 = vmatpush.bf16.msra.mxu0 0
    %744 = vmatpush.bf16.msra.mxu0 0
    %745 = vmatpush.bf16.msra.mxu0 0
    %746 = vmatpush.bf16.msra.mxu0 0
    %747 = vmatpush.bf16.msra.mxu0 0
    %748 = vmatpush.bf16.msra.mxu0 0
    %749 = vmatpush.bf16.msra.mxu0 %v430
    %750 = vmatpush.bf16.msra.mxu0 %v429
    %751 = vmatmul.bf16.gmra.mxu0 %v706
    %v752 = vpop.f32.mrf.mxu0
    %v753 = vadd.f32 %v739, %v752
    %v754 = vpop.f32.mrf.mxu0
    %v755 = vadd.f32 %v741, %v754
    %756 = vdwg.mxu0
    %v757 = vadd.f32 %v753, %v295
    %v758 = vadd.f32 %v755, %v295
    %v759 = vmul.f32 %v757, 0.5
    %v760 = vmul.f32 %v758, 0.5
    %v761 = vtanh.pop %v759
    %v762 = vtanh.pop %v760
    %v763 = vadd.f32 %v761, 1.0
    %v764 = vadd.f32 %v762, 1.0
    %v765 = vmul.f32 %v763, 0.5
    %v766 = vmul.f32 %v764, 0.5
    %v767 = vtanh.pop %v757
    %v768 = vtanh.pop %v758
    %v769 = vmul.f32 %v765, %v634
    %v770 = vmul.f32 %v766, %v635
    %773 = vrot.lane.b32.xlu0 %v767, 32
    %v774 = vpop.permute.xlu0 %773
    %775 = vrot.lane.b32.xlu0 %v768, 32
    %v776 = vpop.permute.xlu0 %775
    %v779 = vmul.f32 %v765, %v774
    %v780 = vmul.f32 %v766, %v776
    %783 = vrot.lane.b32.xlu0 %v779, 32
    %v784 = vpop.permute.xlu0 %783
    %785 = vrot.lane.b32.xlu0 %v780, 32
    %v786 = vpop.permute.xlu0 %785
    %v789 = vadd.f32 %v769, %v784
    %v790 = vadd.f32 %v770, %v786
    %v791 = vtanh.pop %v789
    %v792 = vtanh.pop %v790
    %795 = vrot.lane.b32.xlu0 %v791, 32
    %v796 = vpop.permute.xlu0 %795
    %797 = vrot.lane.b32.xlu0 %v792, 32
    %v798 = vpop.permute.xlu0 %797
    %v801 = vmul.f32 %v765, %v796
    %v802 = vmul.f32 %v766, %v798
    %v803 = vadd.f32 %v648, %v801
    %v804 = vadd.f32 %v649, %v802
    %s805 = scalar_lea.vmem [#allocation2], 24
    %v806 = vld [vmem:[%s805] sm:$0xf]
    %v807 = vld [vmem:[%s805 + $0x4] sm:$0xf]
    %v808 = vunpack.c.l.bf16 %v806
    %v809 = vunpack.c.l.bf16 %v807
    %v810 = vadd.f32 %v808, %v718
    %v811 = vadd.f32 %v809, %v720
    %v812 = vmul.f32 %v810, 0.5
    %v813 = vmul.f32 %v811, 0.5
    %v814 = vtanh.pop %v812
    %v815 = vtanh.pop %v813
    %v816 = vadd.f32 %v814, 1.0
    %v817 = vadd.f32 %v815, 1.0
    %v818 = vmul.f32 %v816, 0.5
    %v819 = vmul.f32 %v817, 0.5
    %v820 = vtanh.pop %v810
    %v821 = vtanh.pop %v811
    %v822 = vmul.f32 %v818, %v687
    %v823 = vmul.f32 %v819, %v688
    %826 = vrot.lane.b32.xlu0 %v820, 32
    %v827 = vpop.permute.xlu0 %826
    %828 = vrot.lane.b32.xlu0 %v821, 32
    %v829 = vpop.permute.xlu0 %828
    %v832 = vmul.f32 %v818, %v827
    %v833 = vmul.f32 %v819, %v829
    %836 = vrot.lane.b32.xlu0 %v832, 32
    %v837 = vpop.permute.xlu0 %836
    %838 = vrot.lane.b32.xlu0 %v833, 32
    %v839 = vpop.permute.xlu0 %838
    %v842 = vadd.f32 %v822, %v837
    %v843 = vadd.f32 %v823, %v839
    %v844 = vtanh.pop %v842
    %v845 = vtanh.pop %v843
    %848 = vrot.lane.b32.xlu0 %v844, 32
    %v849 = vpop.permute.xlu0 %848
    %850 = vrot.lane.b32.xlu0 %v845, 32
    %v851 = vpop.permute.xlu0 %850
    %v854 = vmul.f32 %v818, %v849
    %v855 = vmul.f32 %v819, %v851
    %v856 = vpack.c.bf16 %v855, %v854
    %858 = vrot.lane.b32.xlu0 %v856, 64
    %v859 = vpop.permute.xlu0 %858
    %v861 = vsel %vm187, %v859, 0
    %863 = vmatpush.bf16.msra.mxu0 0
    %864 = vmatpush.bf16.msra.mxu0 0
    %865 = vmatpush.bf16.msra.mxu0 0
    %866 = vmatpush.bf16.msra.mxu0 0
    %867 = vmatpush.bf16.msra.mxu0 0
    %868 = vmatpush.bf16.msra.mxu0 0
    %869 = vmatpush.bf16.msra.mxu0 %v364
    %870 = vmatpush.bf16.msra.mxu0 %v363
    %871 = vmatmul.bf16.gmra.mxu0 %v861
    %v872 = vpop.f32.mrf.mxu0
    %v873 = vadd.f32 0.0, %v872
    %v874 = vpop.f32.mrf.mxu0
    %v875 = vadd.f32 0.0, %v874
    %876 = vdwg.mxu0
    %v877 = vpack.c.bf16 %v802, %v801
    %879 = vrot.lane.b32.xlu0 %v877, 64
    %v880 = vpop.permute.xlu0 %879
    %v882 = vsel %vm187, %v880, 0
    %884 = vmatpush.bf16.msra.mxu0 0
    %885 = vmatpush.bf16.msra.mxu0 0
    %886 = vmatpush.bf16.msra.mxu0 0
    %887 = vmatpush.bf16.msra.mxu0 0
    %888 = vmatpush.bf16.msra.mxu0 0
    %889 = vmatpush.bf16.msra.mxu0 0
    %890 = vmatpush.bf16.msra.mxu0 %v401
    %891 = vmatpush.bf16.msra.mxu0 %v400
    %892 = vmatmul.bf16.gmra.mxu0 %v882
    %v893 = vpop.f32.mrf.mxu0
    %v894 = vadd.f32 0.0, %v893
    %v895 = vpop.f32.mrf.mxu0
    %v896 = vadd.f32 0.0, %v895
    %897 = vdwg.mxu0
    %898 = vmatpush.bf16.msra.mxu0 0
    %899 = vmatpush.bf16.msra.mxu0 0
    %900 = vmatpush.bf16.msra.mxu0 0
    %901 = vmatpush.bf16.msra.mxu0 0
    %902 = vmatpush.bf16.msra.mxu0 0
    %903 = vmatpush.bf16.msra.mxu0 0
    %904 = vmatpush.bf16.msra.mxu0 %v430
    %905 = vmatpush.bf16.msra.mxu0 %v429
    %906 = vmatmul.bf16.gmra.mxu0 %v861
    %v907 = vpop.f32.mrf.mxu0
    %v908 = vadd.f32 %v894, %v907
    %v909 = vpop.f32.mrf.mxu0
    %v910 = vadd.f32 %v896, %v909
    %911 = vdwg.mxu0
    %v912 = vadd.f32 %v908, %v295
    %v913 = vadd.f32 %v910, %v295
    %v914 = vmul.f32 %v912, 0.5
    %v915 = vmul.f32 %v913, 0.5
    %v916 = vtanh.pop %v914
    %v917 = vtanh.pop %v915
    %v918 = vadd.f32 %v916, 1.0
    %v919 = vadd.f32 %v917, 1.0
    %v920 = vmul.f32 %v918, 0.5
    %v921 = vmul.f32 %v919, 0.5
    %v922 = vtanh.pop %v912
    %v923 = vtanh.pop %v913
    %v924 = vmul.f32 %v920, %v789
    %v925 = vmul.f32 %v921, %v790
    %928 = vrot.lane.b32.xlu0 %v922, 32
    %v929 = vpop.permute.xlu0 %928
    %930 = vrot.lane.b32.xlu0 %v923, 32
    %v931 = vpop.permute.xlu0 %930
    %v934 = vmul.f32 %v920, %v929
    %v935 = vmul.f32 %v921, %v931
    %938 = vrot.lane.b32.xlu0 %v934, 32
    %v939 = vpop.permute.xlu0 %938
    %940 = vrot.lane.b32.xlu0 %v935, 32
    %v941 = vpop.permute.xlu0 %940
    %v944 = vadd.f32 %v924, %v939
    %v945 = vadd.f32 %v925, %v941
    %v946 = vtanh.pop %v944
    %v947 = vtanh.pop %v945
    %950 = vrot.lane.b32.xlu0 %v946, 32
    %v951 = vpop.permute.xlu0 %950
    %952 = vrot.lane.b32.xlu0 %v947, 32
    %v953 = vpop.permute.xlu0 %952
    %v956 = vmul.f32 %v920, %v951
    %v957 = vmul.f32 %v921, %v953
    %v958 = vadd.f32 %v803, %v956
    %v959 = vadd.f32 %v804, %v957
    %s960 = scalar_lea.vmem [#allocation2], 32
    %v961 = vld [vmem:[%s960] sm:$0xf]
    %v962 = vld [vmem:[%s960 + $0x4] sm:$0xf]
    %v963 = vunpack.c.l.bf16 %v961
    %v964 = vunpack.c.l.bf16 %v962
    %v965 = vadd.f32 %v963, %v873
    %v966 = vadd.f32 %v964, %v875
    %v967 = vmul.f32 %v965, 0.5
    %v968 = vmul.f32 %v966, 0.5
    %v969 = vtanh.pop %v967
    %v970 = vtanh.pop %v968
    %v971 = vadd.f32 %v969, 1.0
    %v972 = vadd.f32 %v970, 1.0
    %v973 = vmul.f32 %v971, 0.5
    %v974 = vmul.f32 %v972, 0.5
    %v975 = vtanh.pop %v965
    %v976 = vtanh.pop %v966
    %v977 = vmul.f32 %v973, %v842
    %v978 = vmul.f32 %v974, %v843
    %981 = vrot.lane.b32.xlu0 %v975, 32
    %v982 = vpop.permute.xlu0 %981
    %983 = vrot.lane.b32.xlu0 %v976, 32
    %v984 = vpop.permute.xlu0 %983
    %v987 = vmul.f32 %v973, %v982
    %v988 = vmul.f32 %v974, %v984
    %991 = vrot.lane.b32.xlu0 %v987, 32
    %v992 = vpop.permute.xlu0 %991
    %993 = vrot.lane.b32.xlu0 %v988, 32
    %v994 = vpop.permute.xlu0 %993
    %v997 = vadd.f32 %v977, %v992
    %v998 = vadd.f32 %v978, %v994
    %v999 = vtanh.pop %v997
    %v1000 = vtanh.pop %v998
    %1003 = vrot.lane.b32.xlu0 %v999, 32
    %v1004 = vpop.permute.xlu0 %1003
    %1005 = vrot.lane.b32.xlu0 %v1000, 32
    %v1006 = vpop.permute.xlu0 %1005
    %v1009 = vmul.f32 %v973, %v1004
    %v1010 = vmul.f32 %v974, %v1006
    %v1011 = vpack.c.bf16 %v1010, %v1009
    %1013 = vrot.lane.b32.xlu0 %v1011, 64
    %v1014 = vpop.permute.xlu0 %1013
    %v1016 = vsel %vm187, %v1014, 0
    %1018 = vmatpush.bf16.msra.mxu0 0
    %1019 = vmatpush.bf16.msra.mxu0 0
    %1020 = vmatpush.bf16.msra.mxu0 0
    %1021 = vmatpush.bf16.msra.mxu0 0
    %1022 = vmatpush.bf16.msra.mxu0 0
    %1023 = vmatpush.bf16.msra.mxu0 0
    %1024 = vmatpush.bf16.msra.mxu0 %v364
    %1025 = vmatpush.bf16.msra.mxu0 %v363
    %1026 = vmatmul.bf16.gmra.mxu0 %v1016
    %v1027 = vpop.f32.mrf.mxu0
    %v1028 = vadd.f32 0.0, %v1027
    %v1029 = vpop.f32.mrf.mxu0
    %v1030 = vadd.f32 0.0, %v1029
    %1031 = vdwg.mxu0
    %v1032 = vpack.c.bf16 %v957, %v956
    %1034 = vrot.lane.b32.xlu0 %v1032, 64
    %v1035 = vpop.permute.xlu0 %1034
    %v1037 = vsel %vm187, %v1035, 0
    %1039 = vmatpush.bf16.msra.mxu0 0
    %1040 = vmatpush.bf16.msra.mxu0 0
    %1041 = vmatpush.bf16.msra.mxu0 0
    %1042 = vmatpush.bf16.msra.mxu0 0
    %1043 = vmatpush.bf16.msra.mxu0 0
    %1044 = vmatpush.bf16.msra.mxu0 0
    %1045 = vmatpush.bf16.msra.mxu0 %v401
    %1046 = vmatpush.bf16.msra.mxu0 %v400
    %1047 = vmatmul.bf16.gmra.mxu0 %v1037
    %v1048 = vpop.f32.mrf.mxu0
    %v1049 = vadd.f32 0.0, %v1048
    %v1050 = vpop.f32.mrf.mxu0
    %v1051 = vadd.f32 0.0, %v1050
    %1052 = vdwg.mxu0
    %1053 = vmatpush.bf16.msra.mxu0 0
    %1054 = vmatpush.bf16.msra.mxu0 0
    %1055 = vmatpush.bf16.msra.mxu0 0
    %1056 = vmatpush.bf16.msra.mxu0 0
    %1057 = vmatpush.bf16.msra.mxu0 0
    %1058 = vmatpush.bf16.msra.mxu0 0
    %1059 = vmatpush.bf16.msra.mxu0 %v430
    %1060 = vmatpush.bf16.msra.mxu0 %v429
    %1061 = vmatmul.bf16.gmra.mxu0 %v1016
    %v1062 = vpop.f32.mrf.mxu0
    %v1063 = vadd.f32 %v1049, %v1062
    %v1064 = vpop.f32.mrf.mxu0
    %v1065 = vadd.f32 %v1051, %v1064
    %1066 = vdwg.mxu0
    %v1067 = vadd.f32 %v1063, %v295
    %v1068 = vadd.f32 %v1065, %v295
    %v1069 = vmul.f32 %v1067, 0.5
    %v1070 = vmul.f32 %v1068, 0.5
    %v1071 = vtanh.pop %v1069
    %v1072 = vtanh.pop %v1070
    %v1073 = vadd.f32 %v1071, 1.0
    %v1074 = vadd.f32 %v1072, 1.0
    %v1075 = vmul.f32 %v1073, 0.5
    %v1076 = vmul.f32 %v1074, 0.5
    %v1077 = vtanh.pop %v1067
    %v1078 = vtanh.pop %v1068
    %v1079 = vmul.f32 %v1075, %v944
    %v1080 = vmul.f32 %v1076, %v945
    %1083 = vrot.lane.b32.xlu0 %v1077, 32
    %v1084 = vpop.permute.xlu0 %1083
    %1085 = vrot.lane.b32.xlu0 %v1078, 32
    %v1086 = vpop.permute.xlu0 %1085
    %v1089 = vmul.f32 %v1075, %v1084
    %v1090 = vmul.f32 %v1076, %v1086
    %1093 = vrot.lane.b32.xlu0 %v1089, 32
    %v1094 = vpop.permute.xlu0 %1093
    %1095 = vrot.lane.b32.xlu0 %v1090, 32
    %v1096 = vpop.permute.xlu0 %1095
    %v1099 = vadd.f32 %v1079, %v1094
    %v1100 = vadd.f32 %v1080, %v1096
    %v1101 = vtanh.pop %v1099
    %v1102 = vtanh.pop %v1100
    %1105 = vrot.lane.b32.xlu0 %v1101, 32
    %v1106 = vpop.permute.xlu0 %1105
    %1107 = vrot.lane.b32.xlu0 %v1102, 32
    %v1108 = vpop.permute.xlu0 %1107
    %v1111 = vmul.f32 %v1075, %v1106
    %v1112 = vmul.f32 %v1076, %v1108
    %v1113 = vadd.f32 %v958, %v1111
    %v1114 = vadd.f32 %v959, %v1112
    %s1115 = scalar_lea.vmem [#allocation2], 40
    %v1116 = vld [vmem:[%s1115] sm:$0xf]
    %v1117 = vld [vmem:[%s1115 + $0x4] sm:$0xf]
    %v1118 = vunpack.c.l.bf16 %v1116
    %v1119 = vunpack.c.l.bf16 %v1117
    %v1120 = vadd.f32 %v1118, %v1028
    %v1121 = vadd.f32 %v1119, %v1030
    %v1122 = vmul.f32 %v1120, 0.5
    %v1123 = vmul.f32 %v1121, 0.5
    %v1124 = vtanh.pop %v1122
    %v1125 = vtanh.pop %v1123
    %v1126 = vadd.f32 %v1124, 1.0
    %v1127 = vadd.f32 %v1125, 1.0
    %v1128 = vmul.f32 %v1126, 0.5
    %v1129 = vmul.f32 %v1127, 0.5
    %v1130 = vtanh.pop %v1120
    %v1131 = vtanh.pop %v1121
    %v1132 = vmul.f32 %v1128, %v997
    %v1133 = vmul.f32 %v1129, %v998
    %1136 = vrot.lane.b32.xlu0 %v1130, 32
    %v1137 = vpop.permute.xlu0 %1136
    %1138 = vrot.lane.b32.xlu0 %v1131, 32
    %v1139 = vpop.permute.xlu0 %1138
    %v1142 = vmul.f32 %v1128, %v1137
    %v1143 = vmul.f32 %v1129, %v1139
    %1146 = vrot.lane.b32.xlu0 %v1142, 32
    %v1147 = vpop.permute.xlu0 %1146
    %1148 = vrot.lane.b32.xlu0 %v1143, 32
    %v1149 = vpop.permute.xlu0 %1148
    %v1152 = vadd.f32 %v1132, %v1147
    %v1153 = vadd.f32 %v1133, %v1149
    %v1154 = vtanh.pop %v1152
    %v1155 = vtanh.pop %v1153
    %1158 = vrot.lane.b32.xlu0 %v1154, 32
    %v1159 = vpop.permute.xlu0 %1158
    %1160 = vrot.lane.b32.xlu0 %v1155, 32
    %v1161 = vpop.permute.xlu0 %1160
    %v1164 = vmul.f32 %v1128, %v1159
    %v1165 = vmul.f32 %v1129, %v1161
    %v1166 = vpack.c.bf16 %v1165, %v1164
    %1168 = vrot.lane.b32.xlu0 %v1166, 64
    %v1169 = vpop.permute.xlu0 %1168
    %v1171 = vsel %vm187, %v1169, 0
    %1173 = vmatpush.bf16.msra.mxu0 0
    %1174 = vmatpush.bf16.msra.mxu0 0
    %1175 = vmatpush.bf16.msra.mxu0 0
    %1176 = vmatpush.bf16.msra.mxu0 0
    %1177 = vmatpush.bf16.msra.mxu0 0
    %1178 = vmatpush.bf16.msra.mxu0 0
    %1179 = vmatpush.bf16.msra.mxu0 %v364
    %1180 = vmatpush.bf16.msra.mxu0 %v363
    %1181 = vmatmul.bf16.gmra.mxu0 %v1171
    %v1182 = vpop.f32.mrf.mxu0
    %v1183 = vadd.f32 0.0, %v1182
    %v1184 = vpop.f32.mrf.mxu0
    %v1185 = vadd.f32 0.0, %v1184
    %1186 = vdwg.mxu0
    %v1187 = vpack.c.bf16 %v1112, %v1111
    %1189 = vrot.lane.b32.xlu0 %v1187, 64
    %v1190 = vpop.permute.xlu0 %1189
    %v1192 = vsel %vm187, %v1190, 0
    %1194 = vmatpush.bf16.msra.mxu0 0
    %1195 = vmatpush.bf16.msra.mxu0 0
    %1196 = vmatpush.bf16.msra.mxu0 0
    %1197 = vmatpush.bf16.msra.mxu0 0
    %1198 = vmatpush.bf16.msra.mxu0 0
    %1199 = vmatpush.bf16.msra.mxu0 0
    %1200 = vmatpush.bf16.msra.mxu0 %v401
    %1201 = vmatpush.bf16.msra.mxu0 %v400
    %1202 = vmatmul.bf16.gmra.mxu0 %v1192
    %v1203 = vpop.f32.mrf.mxu0
    %v1204 = vadd.f32 0.0, %v1203
    %v1205 = vpop.f32.mrf.mxu0
    %v1206 = vadd.f32 0.0, %v1205
    %1207 = vdwg.mxu0
    %1208 = vmatpush.bf16.msra.mxu0 0
    %1209 = vmatpush.bf16.msra.mxu0 0
    %1210 = vmatpush.bf16.msra.mxu0 0
    %1211 = vmatpush.bf16.msra.mxu0 0
    %1212 = vmatpush.bf16.msra.mxu0 0
    %1213 = vmatpush.bf16.msra.mxu0 0
    %1214 = vmatpush.bf16.msra.mxu0 %v430
    %1215 = vmatpush.bf16.msra.mxu0 %v429
    %1216 = vmatmul.bf16.gmra.mxu0 %v1171
    %v1217 = vpop.f32.mrf.mxu0
    %v1218 = vadd.f32 %v1204, %v1217
    %v1219 = vpop.f32.mrf.mxu0
    %v1220 = vadd.f32 %v1206, %v1219
    %1221 = vdwg.mxu0
    %v1222 = vadd.f32 %v1218, %v295
    %v1223 = vadd.f32 %v1220, %v295
    %v1224 = vmul.f32 %v1222, 0.5
    %v1225 = vmul.f32 %v1223, 0.5
    %v1226 = vtanh.pop %v1224
    %v1227 = vtanh.pop %v1225
    %v1228 = vadd.f32 %v1226, 1.0
    %v1229 = vadd.f32 %v1227, 1.0
    %v1230 = vmul.f32 %v1228, 0.5
    %v1231 = vmul.f32 %v1229, 0.5
    %v1232 = vtanh.pop %v1222
    %v1233 = vtanh.pop %v1223
    %v1234 = vmul.f32 %v1230, %v1099
    %v1235 = vmul.f32 %v1231, %v1100
    %1238 = vrot.lane.b32.xlu0 %v1232, 32
    %v1239 = vpop.permute.xlu0 %1238
    %1240 = vrot.lane.b32.xlu0 %v1233, 32
    %v1241 = vpop.permute.xlu0 %1240
    %v1244 = vmul.f32 %v1230, %v1239
    %v1245 = vmul.f32 %v1231, %v1241
    %1248 = vrot.lane.b32.xlu0 %v1244, 32
    %v1249 = vpop.permute.xlu0 %1248
    %1250 = vrot.lane.b32.xlu0 %v1245, 32
    %v1251 = vpop.permute.xlu0 %1250
    %v1254 = vadd.f32 %v1234, %v1249
    %v1255 = vadd.f32 %v1235, %v1251
    %v1256 = vtanh.pop %v1254
    %v1257 = vtanh.pop %v1255
    %1260 = vrot.lane.b32.xlu0 %v1256, 32
    %v1261 = vpop.permute.xlu0 %1260
    %1262 = vrot.lane.b32.xlu0 %v1257, 32
    %v1263 = vpop.permute.xlu0 %1262
    %v1266 = vmul.f32 %v1230, %v1261
    %v1267 = vmul.f32 %v1231, %v1263
    %v1268 = vadd.f32 %v1113, %v1266
    %v1269 = vadd.f32 %v1114, %v1267
    %s1270 = scalar_lea.vmem [#allocation2], 48
    %v1271 = vld [vmem:[%s1270] sm:$0xf]
    %v1272 = vld [vmem:[%s1270 + $0x4] sm:$0xf]
    %v1273 = vunpack.c.l.bf16 %v1271
    %v1274 = vunpack.c.l.bf16 %v1272
    %v1275 = vadd.f32 %v1273, %v1183
    %v1276 = vadd.f32 %v1274, %v1185
    %v1277 = vmul.f32 %v1275, 0.5
    %v1278 = vmul.f32 %v1276, 0.5
    %v1279 = vtanh.pop %v1277
    %v1280 = vtanh.pop %v1278
    %v1281 = vadd.f32 %v1279, 1.0
    %v1282 = vadd.f32 %v1280, 1.0
    %v1283 = vmul.f32 %v1281, 0.5
    %v1284 = vmul.f32 %v1282, 0.5
    %v1285 = vtanh.pop %v1275
    %v1286 = vtanh.pop %v1276
    %v1287 = vmul.f32 %v1283, %v1152
    %v1288 = vmul.f32 %v1284, %v1153
    %1291 = vrot.lane.b32.xlu0 %v1285, 32
    %v1292 = vpop.permute.xlu0 %1291
    %1293 = vrot.lane.b32.xlu0 %v1286, 32
    %v1294 = vpop.permute.xlu0 %1293
    %v1297 = vmul.f32 %v1283, %v1292
    %v1298 = vmul.f32 %v1284, %v1294
    %1301 = vrot.lane.b32.xlu0 %v1297, 32
    %v1302 = vpop.permute.xlu0 %1301
    %1303 = vrot.lane.b32.xlu0 %v1298, 32
    %v1304 = vpop.permute.xlu0 %1303
    %v1307 = vadd.f32 %v1287, %v1302
    %v1308 = vadd.f32 %v1288, %v1304
    %v1309 = vtanh.pop %v1307
    %v1310 = vtanh.pop %v1308
    %1313 = vrot.lane.b32.xlu0 %v1309, 32
    %v1314 = vpop.permute.xlu0 %1313
    %1315 = vrot.lane.b32.xlu0 %v1310, 32
    %v1316 = vpop.permute.xlu0 %1315
    %v1319 = vmul.f32 %v1283, %v1314
    %v1320 = vmul.f32 %v1284, %v1316
    %v1321 = vpack.c.bf16 %v1320, %v1319
    %1323 = vrot.lane.b32.xlu0 %v1321, 64
    %v1324 = vpop.permute.xlu0 %1323
    %v1326 = vsel %vm187, %v1324, 0
    %1328 = vmatpush.bf16.msra.mxu0 0
    %1329 = vmatpush.bf16.msra.mxu0 0
    %1330 = vmatpush.bf16.msra.mxu0 0
    %1331 = vmatpush.bf16.msra.mxu0 0
    %1332 = vmatpush.bf16.msra.mxu0 0
    %1333 = vmatpush.bf16.msra.mxu0 0
    %1334 = vmatpush.bf16.msra.mxu0 %v364
    %1335 = vmatpush.bf16.msra.mxu0 %v363
    %1336 = vmatmul.bf16.gmra.mxu0 %v1326
    %v1337 = vpop.f32.mrf.mxu0
    %v1338 = vadd.f32 0.0, %v1337
    %v1339 = vpop.f32.mrf.mxu0
    %v1340 = vadd.f32 0.0, %v1339
    %1341 = vdwg.mxu0
    %v1342 = vpack.c.bf16 %v1267, %v1266
    %1344 = vrot.lane.b32.xlu0 %v1342, 64
    %v1345 = vpop.permute.xlu0 %1344
    %v1347 = vsel %vm187, %v1345, 0
    %1349 = vmatpush.bf16.msra.mxu0 0
    %1350 = vmatpush.bf16.msra.mxu0 0
    %1351 = vmatpush.bf16.msra.mxu0 0
    %1352 = vmatpush.bf16.msra.mxu0 0
    %1353 = vmatpush.bf16.msra.mxu0 0
    %1354 = vmatpush.bf16.msra.mxu0 0
    %1355 = vmatpush.bf16.msra.mxu0 %v401
    %1356 = vmatpush.bf16.msra.mxu0 %v400
    %1357 = vmatmul.bf16.gmra.mxu0 %v1347
    %v1358 = vpop.f32.mrf.mxu0
    %v1359 = vadd.f32 0.0, %v1358
    %v1360 = vpop.f32.mrf.mxu0
    %v1361 = vadd.f32 0.0, %v1360
    %1362 = vdwg.mxu0
    %1363 = vmatpush.bf16.msra.mxu0 0
    %1364 = vmatpush.bf16.msra.mxu0 0
    %1365 = vmatpush.bf16.msra.mxu0 0
    %1366 = vmatpush.bf16.msra.mxu0 0
    %1367 = vmatpush.bf16.msra.mxu0 0
    %1368 = vmatpush.bf16.msra.mxu0 0
    %1369 = vmatpush.bf16.msra.mxu0 %v430
    %1370 = vmatpush.bf16.msra.mxu0 %v429
    %1371 = vmatmul.bf16.gmra.mxu0 %v1326
    %v1372 = vpop.f32.mrf.mxu0
    %v1373 = vadd.f32 %v1359, %v1372
    %v1374 = vpop.f32.mrf.mxu0
    %v1375 = vadd.f32 %v1361, %v1374
    %1376 = vdwg.mxu0
    %v1377 = vadd.f32 %v1373, %v295
    %v1378 = vadd.f32 %v1375, %v295
    %v1379 = vmul.f32 %v1377, 0.5
    %v1380 = vmul.f32 %v1378, 0.5
    %v1381 = vtanh.pop %v1379
    %v1382 = vtanh.pop %v1380
    %v1383 = vadd.f32 %v1381, 1.0
    %v1384 = vadd.f32 %v1382, 1.0
    %v1385 = vmul.f32 %v1383, 0.5
    %v1386 = vmul.f32 %v1384, 0.5
    %v1387 = vtanh.pop %v1377
    %v1388 = vtanh.pop %v1378
    %v1389 = vmul.f32 %v1385, %v1254
    %v1390 = vmul.f32 %v1386, %v1255
    %1393 = vrot.lane.b32.xlu0 %v1387, 32
    %v1394 = vpop.permute.xlu0 %1393
    %1395 = vrot.lane.b32.xlu0 %v1388, 32
    %v1396 = vpop.permute.xlu0 %1395
    %v1399 = vmul.f32 %v1385, %v1394
    %v1400 = vmul.f32 %v1386, %v1396
    %1403 = vrot.lane.b32.xlu0 %v1399, 32
    %v1404 = vpop.permute.xlu0 %1403
    %1405 = vrot.lane.b32.xlu0 %v1400, 32
    %v1406 = vpop.permute.xlu0 %1405
    %v1409 = vadd.f32 %v1389, %v1404
    %v1410 = vadd.f32 %v1390, %v1406
    %v1411 = vtanh.pop %v1409
    %v1412 = vtanh.pop %v1410
    %1415 = vrot.lane.b32.xlu0 %v1411, 32
    %v1416 = vpop.permute.xlu0 %1415
    %1417 = vrot.lane.b32.xlu0 %v1412, 32
    %v1418 = vpop.permute.xlu0 %1417
    %v1421 = vmul.f32 %v1385, %v1416
    %v1422 = vmul.f32 %v1386, %v1418
    %v1423 = vadd.f32 %v1268, %v1421
    %v1424 = vadd.f32 %v1269, %v1422
    %s1425 = scalar_lea.vmem [#allocation2], 56
    %v1426 = vld [vmem:[%s1425] sm:$0xf]
    %v1427 = vld [vmem:[%s1425 + $0x4] sm:$0xf]
    %v1428 = vunpack.c.l.bf16 %v1426
    %v1429 = vunpack.c.l.bf16 %v1427
    %v1430 = vadd.f32 %v1428, %v1338
    %v1431 = vadd.f32 %v1429, %v1340
    %v1432 = vmul.f32 %v1430, 0.5
    %v1433 = vmul.f32 %v1431, 0.5
    %v1434 = vtanh.pop %v1432
    %v1435 = vtanh.pop %v1433
    %v1436 = vadd.f32 %v1434, 1.0
    %v1437 = vadd.f32 %v1435, 1.0
    %v1438 = vmul.f32 %v1436, 0.5
    %v1439 = vmul.f32 %v1437, 0.5
    %v1440 = vtanh.pop %v1430
    %v1441 = vtanh.pop %v1431
    %v1442 = vmul.f32 %v1438, %v1307
    %v1443 = vmul.f32 %v1439, %v1308
    %1446 = vrot.lane.b32.xlu0 %v1440, 32
    %v1447 = vpop.permute.xlu0 %1446
    %1448 = vrot.lane.b32.xlu0 %v1441, 32
    %v1449 = vpop.permute.xlu0 %1448
    %v1452 = vmul.f32 %v1438, %v1447
    %v1453 = vmul.f32 %v1439, %v1449
    %1456 = vrot.lane.b32.xlu0 %v1452, 32
    %v1457 = vpop.permute.xlu0 %1456
    %1458 = vrot.lane.b32.xlu0 %v1453, 32
    %v1459 = vpop.permute.xlu0 %1458
    %v1462 = vadd.f32 %v1442, %v1457
    %v1463 = vadd.f32 %v1443, %v1459
    %v1464 = vtanh.pop %v1462
    %v1465 = vtanh.pop %v1463
    %1468 = vrot.lane.b32.xlu0 %v1464, 32
    %v1469 = vpop.permute.xlu0 %1468
    %1470 = vrot.lane.b32.xlu0 %v1465, 32
    %v1471 = vpop.permute.xlu0 %1470
    %v1474 = vmul.f32 %v1438, %v1469
    %v1475 = vmul.f32 %v1439, %v1471
    %v1476 = vpack.c.bf16 %v1475, %v1474
    %v1477 = vpack.c.bf16 %v1422, %v1421
    %1479 = vrot.lane.b32.xlu0 %v1477, 64
    %v1480 = vpop.permute.xlu0 %1479
    %v1482 = vsel %vm187, %v1480, 0
    %1484 = vmatpush.bf16.msra.mxu0 0
    %1485 = vmatpush.bf16.msra.mxu0 0
    %1486 = vmatpush.bf16.msra.mxu0 0
    %1487 = vmatpush.bf16.msra.mxu0 0
    %1488 = vmatpush.bf16.msra.mxu0 0
    %1489 = vmatpush.bf16.msra.mxu0 0
    %1490 = vmatpush.bf16.msra.mxu0 %v401
    %1491 = vmatpush.bf16.msra.mxu0 %v400
    %1492 = vmatmul.bf16.gmra.mxu0 %v1482
    %v1493 = vpop.f32.mrf.mxu0
    %v1494 = vadd.f32 0.0, %v1493
    %v1495 = vpop.f32.mrf.mxu0
    %v1496 = vadd.f32 0.0, %v1495
    %1497 = vdwg.mxu0
    %1499 = vrot.lane.b32.xlu0 %v1476, 64
    %v1500 = vpop.permute.xlu0 %1499
    %v1502 = vsel %vm187, %v1500, 0
    %1504 = vmatpush.bf16.msra.mxu0 0
    %1505 = vmatpush.bf16.msra.mxu0 0
    %1506 = vmatpush.bf16.msra.mxu0 0
    %1507 = vmatpush.bf16.msra.mxu0 0
    %1508 = vmatpush.bf16.msra.mxu0 0
    %1509 = vmatpush.bf16.msra.mxu0 0
    %1510 = vmatpush.bf16.msra.mxu0 %v430
    %1511 = vmatpush.bf16.msra.mxu0 %v429
    %1512 = vmatmul.bf16.gmra.mxu0 %v1502
    %v1513 = vpop.f32.mrf.mxu0
    %v1514 = vadd.f32 %v1494, %v1513
    %v1515 = vpop.f32.mrf.mxu0
    %v1516 = vadd.f32 %v1496, %v1515
    %1517 = vdwg.mxu0
    %v1518 = vadd.f32 %v1514, %v295
    %v1519 = vadd.f32 %v1516, %v295
    %v1520 = vmul.f32 %v1518, 0.5
    %v1521 = vmul.f32 %v1519, 0.5
    %v1522 = vtanh.pop %v1520
    %v1523 = vtanh.pop %v1521
    %v1524 = vadd.f32 %v1522, 1.0
    %v1525 = vadd.f32 %v1523, 1.0
    %v1526 = vmul.f32 %v1524, 0.5
    %v1527 = vmul.f32 %v1525, 0.5
    %v1528 = vtanh.pop %v1518
    %v1529 = vtanh.pop %v1519
    %v1530 = vmul.f32 %v1526, %v1409
    %v1531 = vmul.f32 %v1527, %v1410
    %1534 = vrot.lane.b32.xlu0 %v1528, 32
    %v1535 = vpop.permute.xlu0 %1534
    %1536 = vrot.lane.b32.xlu0 %v1529, 32
    %v1537 = vpop.permute.xlu0 %1536
    %v1540 = vmul.f32 %v1526, %v1535
    %v1541 = vmul.f32 %v1527, %v1537
    %1544 = vrot.lane.b32.xlu0 %v1540, 32
    %v1545 = vpop.permute.xlu0 %1544
    %1546 = vrot.lane.b32.xlu0 %v1541, 32
    %v1547 = vpop.permute.xlu0 %1546
    %v1550 = vadd.f32 %v1530, %v1545
    %v1551 = vadd.f32 %v1531, %v1547
    %v1552 = vtanh.pop %v1550
    %v1553 = vtanh.pop %v1551
    %1556 = vrot.lane.b32.xlu0 %v1552, 32
    %v1557 = vpop.permute.xlu0 %1556
    %1558 = vrot.lane.b32.xlu0 %v1553, 32
    %v1559 = vpop.permute.xlu0 %1558
    %v1562 = vmul.f32 %v1526, %v1557
    %v1563 = vmul.f32 %v1527, %v1559
    %v1564 = vadd.f32 %v1423, %v1562
    %v1565 = vadd.f32 %v1424, %v1563
    %v1566 = vmul.f32 %v1564, 0.125
    %v1567 = vmul.f32 %v1565, 0.125
    %v1568 = vld [vmem:[#allocation10] sm:$0xff]
    %v1569 = vld [vmem:[#allocation10 + $0x8] sm:$0xff]
    %1572 = vrot.lane.b32.xlu0 %v1566, 64
    %v1573 = vpop.permute.xlu0 %1572
    %1574 = vrot.lane.b32.xlu0 %v1567, 64
    %v1575 = vpop.permute.xlu0 %1574
    %v1578 = vmul.f32 %v1568, %v1573
    %v1579 = vmul.f32 %v1569, %v1575
    %v1580 = vsel %vm187, %v1578, 0.0
    %1581 = vadd.xlane.f32.xlu0 %v1580
    %v1582 = vpop.xlane.xlu0 %1581
    %v1583 = vsel %vm187, %v1579, 0.0
    %1584 = vadd.xlane.f32.xlu0 %v1583
    %v1585 = vpop.xlane.xlu0 %1584
    %v1586 = vld [vmem:[%s8] sm:$0xff]
    %v1587 = vld [vmem:[%s8 + $0x8] sm:$0xff]
    %v1588 = vadd.f32 %v1582, %v1586
    %v1589 = vadd.f32 %v1585, %v1587
    %vm1590 = vcmask 7168
    %1591 = vst.msk [vmem:[%s9] sm:$0xff] %vm1590, %v1588
    %1592 = vst.msk [vmem:[%s9 + $0x8] sm:$0xff] %vm1590, %v1589
    // Predicated region
    $region58: #{tpu_custom_call.1} parent=1 // pred_check
      _
    $region59: #{tpu_custom_call.1} parent=1 // pred_check_branch
      %1594 = sbr.rel (0) target = $region61
    $region60: #{tpu_custom_call.1} parent=1 // pred_region
      _
    $region61: #{tpu_custom_call.1} parent=1 // pred_fallthru
      _
    // Predicated region
    $region62: #{tpu_custom_call.1} parent=1 // pred_check
      _
    $region63: #{tpu_custom_call.1} parent=1 // pred_check_branch
      %1596 = sbr.rel (0) target = $region65
    $region64: #{tpu_custom_call.1} parent=1 // pred_region
      _
    $region65: #{tpu_custom_call.1} parent=1 // pred_fallthru
      _
    %1597 = vsyncpa [#allocation4], 1
    %1598 = vsyncpa [#allocation6], 1
    %1599 = vsyncpa [#allocation9], 1

</llo_original>
